<compile_context>
chip_gen: v7x
topology: tpu7x:2x2x1
jax: 0.10.0
libtpu: 0.0.40
codegen_flags: <defaults>
</compile_context>

<pallas_src>
import math
import jax
import jax.numpy as jnp
from jax.experimental import pallas as pl
from jax.experimental.pallas import tpu as pltpu


# ----------------------------- Pallas kernel --------------------------------
def critic_kernel(x_ref, a_ref, w_in_ref, w1s_ref, w1a_ref, w2_ref, wo_ref,
                  b_ref, o_ref):
    H1_P = w_in_ref.shape[1]
    H2_P = w1s_ref.shape[1]
    H3_P = w2_ref.shape[1]
    O_P = wo_ref.shape[1]
    cdt = w_in_ref.dtype  # matmul operand dtype (bf16 fast path / f32 parity path)

    # biases are packed one-per-row in a single f32 buffer (padded lanes are 0)
    b_in = b_ref[0:1, :H1_P]
    b1 = b_ref[1:2, :H2_P]
    b2 = b_ref[2:3, :H3_P]
    bo = b_ref[3:4, :O_P]

    # layer 1 (BatchNorm1d eval-mode transform already folded into W_in / b_in)
    h1 = jnp.dot(x_ref[...], w_in_ref[...],
                 preferred_element_type=jnp.float32) + b_in
    h1 = jnp.maximum(h1, 0.0)

    # layer 2 on concat([h1, actions]) == h1 @ W1s + a @ W1a  (no VMEM concat)
    h2 = (jnp.dot(h1.astype(cdt), w1s_ref[...],
                  preferred_element_type=jnp.float32)
          + jnp.dot(a_ref[...], w1a_ref[...],
                    preferred_element_type=jnp.float32)
          + b1)
    h2 = jnp.maximum(h2, 0.0)

    # layer 3
    h3 = jnp.dot(h2.astype(cdt), w2_ref[...],
                 preferred_element_type=jnp.float32) + b2
    h3 = jnp.maximum(h3, 0.0)

    # output head (dropout is identity in eval mode); 128-lane dense store
    o_ref[...] = jnp.dot(h3.astype(cdt), wo_ref[...],
                         preferred_element_type=jnp.float32) + bo


# ------------------------------ helpers --------------------------------------
def _pad_to(x, rows, cols):
    r, c = x.shape
    return jnp.pad(x, ((0, rows - r), (0, cols - c)))


def _round_up(n, m):
    return ((n + m - 1) // m) * m


# ----------------------- one-time parameter packing ---------------------------
def pack_critic_params(params, *, compute_dtype=jnp.bfloat16, bn_eps=1e-5):
    """Transpose / pad / BN-fold / cast the weights once (hoisted out of the
    per-call wrapper).  Returns a dict of device arrays ready for the kernel."""
    H1, H2, H3 = 500, 300, 200
    w_in, b_in = params["w_in"], params["b_in"]          # (500, S), (500,)
    w1, b1 = params["w1"], params["b1"]                  # (300, 500+A), (300,)
    w2, b2 = params["w2"], params["b2"]                  # (200, 300), (200,)
    wo, bo = params["wo"], params["bo"]                  # (1, 200), (1,)
    S = w_in.shape[1]
    A = w1.shape[1] - H1

    # BatchNorm1d (eval): x_bn = (x - mean) / sqrt(var + eps) * gamma + beta
    mean = params.get("bn_mean", jnp.zeros((S,), jnp.float32))
    var = params.get("bn_var", jnp.ones((S,), jnp.float32))
    gamma = params.get("bn_gamma", jnp.ones((S,), jnp.float32))
    beta = params.get("bn_beta", jnp.zeros((S,), jnp.float32))
    scale = gamma / jnp.sqrt(var + bn_eps)               # (S,)
    shift = beta - mean * scale                          # (S,)
    w_in_eff = w_in * scale[None, :]                     # (500, S)
    b_in_eff = b_in + w_in @ shift                       # (500,)

    S_P, A_P = _round_up(S, 128), _round_up(A, 128)
    H1_P, H2_P, H3_P, O_P = (_round_up(H1, 128), _round_up(H2, 128),
                             _round_up(H3, 128), 128)
    wmax = max(H1_P, H2_P, H3_P, O_P)

    packed = dict(
        w_in=_pad_to(w_in_eff.T, S_P, H1_P).astype(compute_dtype),
        w1s=_pad_to(w1[:, :H1].T, H1_P, H2_P).astype(compute_dtype),
        w1a=_pad_to(w1[:, H1:].T, A_P, H2_P).astype(compute_dtype),
        w2=_pad_to(w2.T, H2_P, H3_P).astype(compute_dtype),
        wo=_pad_to(wo.T, H3_P, O_P).astype(compute_dtype),
    )

    # pack the four bias vectors into a single (8, wmax) f32 buffer (one DMA)
    bias = jnp.zeros((8, wmax), jnp.float32)
    bias = bias.at[0, :H1].set(b_in_eff)
    bias = bias.at[1, :H2].set(b1)
    bias = bias.at[2, :H3].set(b2)
    bias = bias.at[3, :1].set(bo)
    packed["bias"] = bias
    return packed


# ------------------------------ host wrapper ---------------------------------
def critic_forward(states, actions, packed, *, tile_b=512):
    """states: (B, S) f32, actions: (B, A) f32 -> (B, 1) f32."""
    B, S = states.shape
    _, A = actions.shape

    w_in_p, w1s_p, w1a_p = packed["w_in"], packed["w1s"], packed["w1a"]
    w2_p, wo_p, bias_p = packed["w2"], packed["wo"], packed["bias"]
    cdt = w_in_p.dtype
    S_P, H1_P = w_in_p.shape
    A_P, H2_P = w1a_p.shape
    H3_P = w2_p.shape[1]
    O_P = wo_p.shape[1]

    # batch tiling: TB rows per grid step.  512 amortizes the ~0.35 us
    # per-grid-step overhead and keeps the 256-wide MXU fully populated on
    # v6e/v7x; small batches fall back to a single (8-aligned) tile.
    TB = tile_b if B >= tile_b else _round_up(B, 8)
    B_P = _round_up(B, TB)

    x_p = _pad_to(states.astype(cdt), B_P, S_P)
    a_p = _pad_to(actions.astype(cdt), B_P, A_P)

    out = pl.pallas_call(
        critic_kernel,
        out_shape=jax.ShapeDtypeStruct((B_P, O_P), jnp.float32),
        grid_spec=pltpu.PrefetchScalarGridSpec(
            num_scalar_prefetch=0,
            grid=(B_P // TB,),
            in_specs=[
                pl.BlockSpec((TB, S_P), lambda i: (i, 0)),    # activations stream
                pl.BlockSpec((TB, A_P), lambda i: (i, 0)),
                pl.BlockSpec((S_P, H1_P), lambda i: (0, 0)),  # weights resident
                pl.BlockSpec((H1_P, H2_P), lambda i: (0, 0)),
                pl.BlockSpec((A_P, H2_P), lambda i: (0, 0)),
                pl.BlockSpec((H2_P, H3_P), lambda i: (0, 0)),
                pl.BlockSpec((H3_P, O_P), lambda i: (0, 0)),
                pl.BlockSpec(bias_p.shape, lambda i: (0, 0)),
            ],
            out_specs=pl.BlockSpec((TB, O_P), lambda i: (i, 0)),
        ),
        compiler_params=pltpu.CompilerParams(
            dimension_semantics=("parallel",)),
    )(x_p, a_p, w_in_p, w1s_p, w1a_p, w2_p, wo_p, bias_p)

    return out[:B, :1]


# ------------------------- deterministic parameter init ----------------------
def init_critic_params(key, state_size, action_size):
    H1, H2, H3 = 500, 300, 200
    ks = jax.random.split(key, 8)

    def u(k, shape, lim):
        return jax.random.uniform(k, shape, jnp.float32, -lim, lim)

    # weights follow the module's reset_parameters (lim = 1/sqrt(out_features))
    w_in = u(ks[0], (H1, state_size), 1.0 / math.sqrt(H1))
    w1 = u(ks[1], (H2, H1 + action_size), 1.0 / math.sqrt(H2))
    w2 = u(ks[2], (H3, H2), 1.0 / math.sqrt(H3))
    wo = u(ks[3], (1, H3), 3e-3)

    # biases keep PyTorch's default Linear init: U(-1/sqrt(fan_in), 1/sqrt(fan_in))
    b_in = u(ks[4], (H1,), 1.0 / math.sqrt(state_size))
    b1 = u(ks[5], (H2,), 1.0 / math.sqrt(H1 + action_size))
    b2 = u(ks[6], (H3,), 1.0 / math.sqrt(H2))
    bo = u(ks[7], (1,), 1.0 / math.sqrt(H3))

    return dict(w_in=w_in, b_in=b_in, w1=w1, b1=b1, w2=w2, b2=b2, wo=wo, bo=bo)


# ------------------------------ pure-JAX reference ----------------------------
def critic_reference(states, actions, params, bn_eps=1e-5):
    S = states.shape[1]
    mean = params.get("bn_mean", jnp.zeros((S,), jnp.float32))
    var = params.get("bn_var", jnp.ones((S,), jnp.float32))
    gamma = params.get("bn_gamma", jnp.ones((S,), jnp.float32))
    beta = params.get("bn_beta", jnp.zeros((S,), jnp.float32))
    x = (states - mean) / jnp.sqrt(var + bn_eps) * gamma + beta
    h1 = jax.nn.relu(x @ params["w_in"].T + params["b_in"])
    y = jnp.concatenate([h1, actions], axis=1)
    h2 = jax.nn.relu(y @ params["w1"].T + params["b1"])
    h3 = jax.nn.relu(h2 @ params["w2"].T + params["b2"])
    return h3 @ params["wo"].T + params["bo"]


if __name__ == "__main__":
    B, STATE, ACTION = 8, 16, 4
    key = jax.random.PRNGKey(0)
    k_s, k_a, k_p, k_m, k_v, k_g, k_b = jax.random.split(key, 7)

    states = jax.random.normal(k_s, (B, STATE), jnp.float32)
    actions = jax.random.normal(k_a, (B, ACTION), jnp.float32)
    params = init_critic_params(k_p, STATE, ACTION)
    # non-trivial BatchNorm running stats / affine params to exercise the fold
    params["bn_mean"] = 0.5 * jax.random.normal(k_m, (STATE,), jnp.float32)
    params["bn_var"] = jax.random.uniform(k_v, (STATE,), jnp.float32, 0.5, 2.0)
    params["bn_gamma"] = jax.random.uniform(k_g, (STATE,), jnp.float32, 0.5, 1.5)
    params["bn_beta"] = 0.1 * jax.random.normal(k_b, (STATE,), jnp.float32)

    q_ref = critic_reference(states, actions, params)

    # 1) strict f32 parity path
    packed_f32 = pack_critic_params(params, compute_dtype=jnp.float32)
    q32 = jax.block_until_ready(critic_forward(states, actions, packed_f32))
    assert q32.shape == (B, 1), q32.shape
    assert jnp.allclose(q32, q_ref, atol=1e-4, rtol=1e-4), (q32, q_ref)

    # 2) default fast path: bf16 matmul operands, f32 accumulation
    packed_bf16 = pack_critic_params(params, compute_dtype=jnp.bfloat16)
    q16 = jax.block_until_ready(critic_forward(states, actions, packed_bf16))
    assert q16.shape == (B, 1), q16.shape
    assert jnp.allclose(q16, q_ref, atol=1e-2, rtol=1e-2), (q16, q_ref)

    # 3) multi-tile grid path (batch split across grid steps / TensorCores)
    B2 = 24
    states2 = jax.random.normal(k_s, (B2, STATE), jnp.float32)
    actions2 = jax.random.normal(k_a, (B2, ACTION), jnp.float32)
    q2 = jax.block_until_ready(
        critic_forward(states2, actions2, packed_bf16, tile_b=8))
    q2_ref = critic_reference(states2, actions2, params)
    assert q2.shape == (B2, 1), q2.shape
    assert jnp.allclose(q2, q2_ref, atol=1e-2, rtol=1e-2), (q2, q2_ref)

    print("KERNEL_OK")
</pallas_src>

<mosaic_0001>
module attributes {stable_mosaic.version = 11 : i64} {
  func.func @critic_kernel(%arg0: i32, %arg1: memref<8x128xf32, #tpu.memory_space<vmem>>, %arg2: memref<8x128xf32, #tpu.memory_space<vmem>>, %arg3: memref<128x512xf32, #tpu.memory_space<vmem>>, %arg4: memref<512x384xf32, #tpu.memory_space<vmem>>, %arg5: memref<128x384xf32, #tpu.memory_space<vmem>>, %arg6: memref<384x256xf32, #tpu.memory_space<vmem>>, %arg7: memref<256x128xf32, #tpu.memory_space<vmem>>, %arg8: memref<8x512xf32, #tpu.memory_space<vmem>>, %arg9: memref<8x128xf32, #tpu.memory_space<vmem>>) attributes {dimension_semantics = [#tpu.dimension_semantics<parallel>], iteration_bounds = array<i64: 1>, scalar_prefetch = 0 : i64, scratch_operands = 0 : i64, tpu.core_type = #tpu.core_type<tc>, window_params = [{transform_indices = @transform_0, window_bounds = array<i64: 8, 128>}, {transform_indices = @transform_1, window_bounds = array<i64: 8, 128>}, {pipeline_mode = #tpu.pipeline_mode<synchronous>, transform_indices = @transform_2, window_bounds = array<i64: 128, 512>}, {pipeline_mode = #tpu.pipeline_mode<synchronous>, transform_indices = @transform_3, window_bounds = array<i64: 512, 384>}, {pipeline_mode = #tpu.pipeline_mode<synchronous>, transform_indices = @transform_4, window_bounds = array<i64: 128, 384>}, {pipeline_mode = #tpu.pipeline_mode<synchronous>, transform_indices = @transform_5, window_bounds = array<i64: 384, 256>}, {pipeline_mode = #tpu.pipeline_mode<synchronous>, transform_indices = @transform_6, window_bounds = array<i64: 256, 128>}, {pipeline_mode = #tpu.pipeline_mode<synchronous>, transform_indices = @transform_7, window_bounds = array<i64: 8, 512>}, {transform_indices = @transform_8, window_bounds = array<i64: 8, 128>}]} {
    %c0 = arith.constant 0 : index
    %c0_0 = arith.constant 0 : index
    %0 = vector.load %arg8[%c0, %c0_0] : memref<8x512xf32, #tpu.memory_space<vmem>>, vector<1x512xf32>
    %c1 = arith.constant 1 : index
    %c0_1 = arith.constant 0 : index
    %1 = vector.load %arg8[%c1, %c0_1] : memref<8x512xf32, #tpu.memory_space<vmem>>, vector<1x384xf32>
    %c2 = arith.constant 2 : index
    %c0_2 = arith.constant 0 : index
    %2 = vector.load %arg8[%c2, %c0_2] : memref<8x512xf32, #tpu.memory_space<vmem>>, vector<1x256xf32>
    %c3 = arith.constant 3 : index
    %c0_3 = arith.constant 0 : index
    %3 = vector.load %arg8[%c3, %c0_3] : memref<8x512xf32, #tpu.memory_space<vmem>>, vector<1x128xf32>
    %c0_4 = arith.constant 0 : index
    %c0_5 = arith.constant 0 : index
    %4 = vector.load %arg1[%c0_4, %c0_5] : memref<8x128xf32, #tpu.memory_space<vmem>>, vector<8x128xf32>
    %c0_6 = arith.constant 0 : index
    %c0_7 = arith.constant 0 : index
    %5 = vector.load %arg3[%c0_6, %c0_7] : memref<128x512xf32, #tpu.memory_space<vmem>>, vector<128x512xf32>
    %cst = arith.constant dense<0.000000e+00> : vector<8x512xf32>
    %6 = tpu.matmul %4, %5, %cst {dimension_numbers = #tpu.dot_dimension_numbers<[1], [0], [0], [1], [0, 0, 1, 1], [], []>} : vector<8x128xf32>, vector<128x512xf32>, vector<8x512xf32> -> vector<8x512xf32>
    %7 = vector.broadcast %0 : vector<1x512xf32> to vector<8x512xf32>
    %8 = arith.addf %6, %7 : vector<8x512xf32>
    %cst_8 = arith.constant 0.000000e+00 : f32
    %9 = vector.broadcast %cst_8 : f32 to vector<8x512xf32>
    %10 = arith.maximumf %8, %9 : vector<8x512xf32>
    %c0_9 = arith.constant 0 : index
    %c0_10 = arith.constant 0 : index
    %11 = vector.load %arg4[%c0_9, %c0_10] : memref<512x384xf32, #tpu.memory_space<vmem>>, vector<512x384xf32>
    %cst_11 = arith.constant dense<0.000000e+00> : vector<8x384xf32>
    %12 = tpu.matmul %10, %11, %cst_11 {dimension_numbers = #tpu.dot_dimension_numbers<[1], [0], [0], [1], [0, 0, 1, 1], [], []>} : vector<8x512xf32>, vector<512x384xf32>, vector<8x384xf32> -> vector<8x384xf32>
    %c0_12 = arith.constant 0 : index
    %c0_13 = arith.constant 0 : index
    %13 = vector.load %arg2[%c0_12, %c0_13] : memref<8x128xf32, #tpu.memory_space<vmem>>, vector<8x128xf32>
    %c0_14 = arith.constant 0 : index
    %c0_15 = arith.constant 0 : index
    %14 = vector.load %arg5[%c0_14, %c0_15] : memref<128x384xf32, #tpu.memory_space<vmem>>, vector<128x384xf32>
    %cst_16 = arith.constant dense<0.000000e+00> : vector<8x384xf32>
    %15 = tpu.matmul %13, %14, %cst_16 {dimension_numbers = #tpu.dot_dimension_numbers<[1], [0], [0], [1], [0, 0, 1, 1], [], []>} : vector<8x128xf32>, vector<128x384xf32>, vector<8x384xf32> -> vector<8x384xf32>
    %16 = arith.addf %12, %15 : vector<8x384xf32>
    %17 = vector.broadcast %1 : vector<1x384xf32> to vector<8x384xf32>
    %18 = arith.addf %16, %17 : vector<8x384xf32>
    %cst_17 = arith.constant 0.000000e+00 : f32
    %19 = vector.broadcast %cst_17 : f32 to vector<8x384xf32>
    %20 = arith.maximumf %18, %19 : vector<8x384xf32>
    %c0_18 = arith.constant 0 : index
    %c0_19 = arith.constant 0 : index
    %21 = vector.load %arg6[%c0_18, %c0_19] : memref<384x256xf32, #tpu.memory_space<vmem>>, vector<384x256xf32>
    %cst_20 = arith.constant dense<0.000000e+00> : vector<8x256xf32>
    %22 = tpu.matmul %20, %21, %cst_20 {dimension_numbers = #tpu.dot_dimension_numbers<[1], [0], [0], [1], [0, 0, 1, 1], [], []>} : vector<8x384xf32>, vector<384x256xf32>, vector<8x256xf32> -> vector<8x256xf32>
    %23 = vector.broadcast %2 : vector<1x256xf32> to vector<8x256xf32>
    %24 = arith.addf %22, %23 : vector<8x256xf32>
    %cst_21 = arith.constant 0.000000e+00 : f32
    %25 = vector.broadcast %cst_21 : f32 to vector<8x256xf32>
    %26 = arith.maximumf %24, %25 : vector<8x256xf32>
    %c0_22 = arith.constant 0 : index
    %c0_23 = arith.constant 0 : index
    %27 = vector.load %arg7[%c0_22, %c0_23] : memref<256x128xf32, #tpu.memory_space<vmem>>, vector<256x128xf32>
    %cst_24 = arith.constant dense<0.000000e+00> : vector<8x128xf32>
    %28 = tpu.matmul %26, %27, %cst_24 {dimension_numbers = #tpu.dot_dimension_numbers<[1], [0], [0], [1], [0, 0, 1, 1], [], []>} : vector<8x256xf32>, vector<256x128xf32>, vector<8x128xf32> -> vector<8x128xf32>
    %29 = vector.broadcast %3 : vector<1x128xf32> to vector<8x128xf32>
    %30 = arith.addf %28, %29 : vector<8x128xf32>
    %c0_25 = arith.constant 0 : index
    %c0_26 = arith.constant 0 : index
    %31 = vector.load %arg9[%c0_25, %c0_26] : memref<8x128xf32, #tpu.memory_space<vmem>>, vector<8x128xf32>
    tpu.vector_store %arg9[%c0_25, %c0_26], %30 {strides = array<i32>} : memref<8x128xf32, #tpu.memory_space<vmem>>, vector<8x128xf32>,
    return
  }
  func.func @transform_0(%arg0: i32) -> (i32, i32) {
    %c0_i32 = arith.constant 0 : i32
    %c0_i32_0 = arith.constant 0 : i32
    return %arg0, %c0_i32 : i32, i32
  }
  func.func @transform_1(%arg0: i32) -> (i32, i32) {
    %c0_i32 = arith.constant 0 : i32
    %c0_i32_0 = arith.constant 0 : i32
    return %arg0, %c0_i32 : i32, i32
  }
  func.func @transform_2(%arg0: i32) -> (i32, i32) {
    %c0_i32 = arith.constant 0 : i32
    %c0_i32_0 = arith.constant 0 : i32
    %c0_i32_1 = arith.constant 0 : i32
    return %c0_i32, %c0_i32_0 : i32, i32
  }
  func.func @transform_3(%arg0: i32) -> (i32, i32) {
    %c0_i32 = arith.constant 0 : i32
    %c0_i32_0 = arith.constant 0 : i32
    %c0_i32_1 = arith.constant 0 : i32
    return %c0_i32, %c0_i32_0 : i32, i32
  }
  func.func @transform_4(%arg0: i32) -> (i32, i32) {
    %c0_i32 = arith.constant 0 : i32
    %c0_i32_0 = arith.constant 0 : i32
    %c0_i32_1 = arith.constant 0 : i32
    return %c0_i32, %c0_i32_0 : i32, i32
  }
  func.func @transform_5(%arg0: i32) -> (i32, i32) {
    %c0_i32 = arith.constant 0 : i32
    %c0_i32_0 = arith.constant 0 : i32
    %c0_i32_1 = arith.constant 0 : i32
    return %c0_i32, %c0_i32_0 : i32, i32
  }
  func.func @transform_6(%arg0: i32) -> (i32, i32) {
    %c0_i32 = arith.constant 0 : i32
    %c0_i32_0 = arith.constant 0 : i32
    %c0_i32_1 = arith.constant 0 : i32
    return %c0_i32, %c0_i32_0 : i32, i32
  }
  func.func @transform_7(%arg0: i32) -> (i32, i32) {
    %c0_i32 = arith.constant 0 : i32
    %c0_i32_0 = arith.constant 0 : i32
    %c0_i32_1 = arith.constant 0 : i32
    return %c0_i32, %c0_i32_0 : i32, i32
  }
  func.func @transform_8(%arg0: i32) -> (i32, i32) {
    %c0_i32 = arith.constant 0 : i32
    %c0_i32_0 = arith.constant 0 : i32
    return %arg0, %c0_i32 : i32, i32
  }
}

</mosaic_0001>

<llo_original>
// kernel: tpu_custom_call.1
$region0: #{tpu_custom_call.1}
  #allocation0 [shape = 'u32[]', space=smem, size = 0x4, offset = 0x4, fixed_abs, tag = 'smem constant byte address 0x4 - core index']
  #allocation1 [shape = 'u32[144,128]{1,0:T(1,128)}', space=vmem, size = 0x12000, scoped, tag = 'internal scratch']
  %s0 = inlined_call_operand.hbm [shape: f32[8,128], index: 0, kind: input, shape index: {}]
  %s1 = inlined_call_operand.hbm [shape: f32[8,128], index: 1, kind: input, shape index: {}]
  %s2 = inlined_call_operand.hbm [shape: f32[128,512], index: 2, kind: input, shape index: {}]
  %s3 = inlined_call_operand.hbm [shape: f32[512,384], index: 3, kind: input, shape index: {}]
  %s4 = inlined_call_operand.hbm [shape: f32[128,384], index: 4, kind: input, shape index: {}]
  %s5 = inlined_call_operand.hbm [shape: f32[384,256], index: 5, kind: input, shape index: {}]
  %s6 = inlined_call_operand.hbm [shape: f32[256,128], index: 6, kind: input, shape index: {}]
  %s7 = inlined_call_operand.hbm [shape: f32[8,512], index: 7, kind: input, shape index: {}]
  %s8 = inlined_call_operand.hbm [shape: f32[8,128], index: 8, kind: output, shape index: {}]
  %s9 = sld [smem:[#allocation0]]
  $region74: #{tpu_custom_call.1} parent=0
    _
  %s11 = ssub.s32 1, %s9
  %s12 = scalar_select 0, %s11, %s9
  $region1: #{tpu_custom_call.1} parent=0
    #allocation2 [shape = 'u8[4096]{0}', space=vmem, size = 0x1000, scoped, tag = 'input window, operand 0, single buffered']
    #allocation3 [shape = 's32[1]{0}', space=sflag, size = 0x4, scoped, tag = 'scoped memory for tpu_custom_call.1']
    #allocation4 [shape = 's32[1]{0}', space=sflag, size = 0x4, scoped, tag = 'scoped memory for tpu_custom_call.1']
    #allocation5 [shape = 'u8[4096]{0}', space=vmem, size = 0x1000, scoped, tag = 'input window, operand 1, single buffered']
    #allocation6 [shape = 's32[1]{0}', space=sflag, size = 0x4, scoped, tag = 'scoped memory for tpu_custom_call.1']
    #allocation7 [shape = 'u8[262144]{0}', space=vmem, size = 0x40000, scoped, tag = 'input window, operand 2, single buffered']
    #allocation8 [shape = 'u8[786432]{0}', space=vmem, size = 0xc0000, scoped, tag = 'input window, operand 3, single buffered']
    #allocation9 [shape = 's32[1]{0}', space=sflag, size = 0x4, scoped, tag = 'scoped memory for tpu_custom_call.1']
    #allocation10 [shape = 'u8[196608]{0}', space=vmem, size = 0x30000, scoped, tag = 'input window, operand 4, single buffered']
    #allocation11 [shape = 'u8[393216]{0}', space=vmem, size = 0x60000, scoped, tag = 'input window, operand 5, single buffered']
    #allocation12 [shape = 's32[1]{0}', space=sflag, size = 0x4, scoped, tag = 'scoped memory for tpu_custom_call.1']
    #allocation13 [shape = 'u8[131072]{0}', space=vmem, size = 0x20000, scoped, tag = 'input window, operand 6, single buffered']
    #allocation14 [shape = 'u8[16384]{0}', space=vmem, size = 0x4000, scoped, tag = 'input window, operand 7, single buffered']
    #allocation15 [shape = 's32[1]{0}', space=sflag, size = 0x4, scoped, tag = 'scoped memory for tpu_custom_call.1']
    #allocation16 [shape = 'u8[4096]{0}', space=vmem, size = 0x1000, scoped, tag = 'output window, operand 0, single buffered']
    %13 = vsyncpa [#allocation3], 0
    %14 = vsyncpa [#allocation6], 0
    %15 = vsyncpa [#allocation9], 0
    %16 = vsyncpa [#allocation12], 0
    %17 = vsyncpa [#allocation15], 0
    %18 = vsyncpa [#allocation4], 0
    // Predicated region
    $region2: #{tpu_custom_call.1} parent=1 // pred_check
      _
    $region3: #{tpu_custom_call.1} parent=1 // pred_check_branch
      %20 = sbr.rel (0) target = $region5
    $region4: #{tpu_custom_call.1} parent=1 // pred_region
      %s22 = ssub.s32 128, 128
      %23 = vsyncadd [#allocation3], %s22
      %s25 = sshll.u32 [#allocation2], 4
      %s26 = int_to_ptr.vmem [resolvable:$true] %s25
      %28 = dma.hbm_to_vmem [thread:$0]  %s0, 128, %s26, [#allocation3]
    $region5: #{tpu_custom_call.1} parent=1 // pred_fallthru
      _
    // Predicated region
    $region6: #{tpu_custom_call.1} parent=1 // pred_check
      _
    $region7: #{tpu_custom_call.1} parent=1 // pred_check_branch
      %30 = sbr.rel (0) target = $region9
    $region8: #{tpu_custom_call.1} parent=1 // pred_region
      %s32 = ssub.s32 128, 128
      %33 = vsyncadd [#allocation6], %s32
      %s35 = sshll.u32 [#allocation5], 4
      %s36 = int_to_ptr.vmem [resolvable:$true] %s35
      %38 = dma.hbm_to_vmem [thread:$0]  %s1, 128, %s36, [#allocation6]
    $region9: #{tpu_custom_call.1} parent=1 // pred_fallthru
      _
    // Predicated region
    $region10: #{tpu_custom_call.1} parent=1 // pred_check
      _
    $region11: #{tpu_custom_call.1} parent=1 // pred_check_branch
      %40 = sbr.rel (0) target = $region13
    $region12: #{tpu_custom_call.1} parent=1 // pred_region
      %s42 = ssub.s32 8192, 8192
      %43 = vsyncadd [#allocation6], %s42
      %s44 = sshll.u32 [#allocation7], 4
      %s45 = int_to_ptr.vmem [resolvable:$true] %s44
      %50 = dma.hbm_to_vmem [thread:$0]  %s2, 8192, %s45, [#allocation6], 512, 512, 32
    $region13: #{tpu_custom_call.1} parent=1 // pred_fallthru
      _
    // Predicated region
    $region14: #{tpu_custom_call.1} parent=1 // pred_check
      _
    $region15: #{tpu_custom_call.1} parent=1 // pred_check_branch
      %52 = sbr.rel (0) target = $region17
    $region16: #{tpu_custom_call.1} parent=1 // pred_region
      %s54 = ssub.s32 24576, 24576
      %55 = vsyncadd [#allocation9], %s54
      %s56 = sshll.u32 [#allocation8], 4
      %s57 = int_to_ptr.vmem [resolvable:$true] %s56
      %62 = dma.hbm_to_vmem [thread:$0]  %s3, 24576, %s57, [#allocation9], 384, 384, 24
    $region17: #{tpu_custom_call.1} parent=1 // pred_fallthru
      _
    // Predicated region
    $region18: #{tpu_custom_call.1} parent=1 // pred_check
      _
    $region19: #{tpu_custom_call.1} parent=1 // pred_check_branch
      %64 = sbr.rel (0) target = $region21
    $region20: #{tpu_custom_call.1} parent=1 // pred_region
      %s66 = ssub.s32 6144, 6144
      %67 = vsyncadd [#allocation9], %s66
      %s68 = sshll.u32 [#allocation10], 4
      %s69 = int_to_ptr.vmem [resolvable:$true] %s68
      %74 = dma.hbm_to_vmem [thread:$0]  %s4, 6144, %s69, [#allocation9], 384, 384, 24
    $region21: #{tpu_custom_call.1} parent=1 // pred_fallthru
      _
    // Predicated region
    $region22: #{tpu_custom_call.1} parent=1 // pred_check
      _
    $region23: #{tpu_custom_call.1} parent=1 // pred_check_branch
      %76 = sbr.rel (0) target = $region25
    $region24: #{tpu_custom_call.1} parent=1 // pred_region
      %s78 = ssub.s32 12288, 12288
      %79 = vsyncadd [#allocation12], %s78
      %s80 = sshll.u32 [#allocation11], 4
      %s81 = int_to_ptr.vmem [resolvable:$true] %s80
      %86 = dma.hbm_to_vmem [thread:$0]  %s5, 12288, %s81, [#allocation12], 256, 256, 16
    $region25: #{tpu_custom_call.1} parent=1 // pred_fallthru
      _
    // Predicated region
    $region26: #{tpu_custom_call.1} parent=1 // pred_check
      _
    $region27: #{tpu_custom_call.1} parent=1 // pred_check_branch
      %88 = sbr.rel (0) target = $region29
    $region28: #{tpu_custom_call.1} parent=1 // pred_region
      %s90 = ssub.s32 4096, 4096
      %91 = vsyncadd [#allocation12], %s90
      %s92 = sshll.u32 [#allocation13], 4
      %s93 = int_to_ptr.vmem [resolvable:$true] %s92
      %98 = dma.hbm_to_vmem [thread:$0]  %s6, 4096, %s93, [#allocation12], 128, 128, 8
    $region29: #{tpu_custom_call.1} parent=1 // pred_fallthru
      _
    // Predicated region
    $region30: #{tpu_custom_call.1} parent=1 // pred_check
      _
    $region31: #{tpu_custom_call.1} parent=1 // pred_check_branch
      %100 = sbr.rel (0) target = $region33
    $region32: #{tpu_custom_call.1} parent=1 // pred_region
      %s102 = ssub.s32 512, 512
      %103 = vsyncadd [#allocation15], %s102
      %s105 = sshll.u32 [#allocation14], 4
      %s106 = int_to_ptr.vmem [resolvable:$true] %s105
      %108 = dma.hbm_to_vmem [thread:$0]  %s7, 512, %s106, [#allocation15]
    $region33: #{tpu_custom_call.1} parent=1 // pred_fallthru
      _
    // Predicated region
    $region34: #{tpu_custom_call.1} parent=1 // pred_check
      _
    $region35: #{tpu_custom_call.1} parent=1 // pred_check_branch
      %110 = sbr.rel (0) target = $region37
    $region36: #{tpu_custom_call.1} parent=1 // pred_region
      %111 = dma.done [#allocation3], 128
    $region37: #{tpu_custom_call.1} parent=1 // pred_fallthru
      _
    // Predicated region
    $region38: #{tpu_custom_call.1} parent=1 // pred_check
      _
    $region39: #{tpu_custom_call.1} parent=1 // pred_check_branch
      %113 = sbr.rel (0) target = $region41
    $region40: #{tpu_custom_call.1} parent=1 // pred_region
      %114 = dma.done [#allocation6], 128
    $region41: #{tpu_custom_call.1} parent=1 // pred_fallthru
      _
    // Predicated region
    $region42: #{tpu_custom_call.1} parent=1 // pred_check
      _
    $region43: #{tpu_custom_call.1} parent=1 // pred_check_branch
      %116 = sbr.rel (0) target = $region45
    $region44: #{tpu_custom_call.1} parent=1 // pred_region
      %117 = dma.done [#allocation6], 8192
    $region45: #{tpu_custom_call.1} parent=1 // pred_fallthru
      _
    // Predicated region
    $region46: #{tpu_custom_call.1} parent=1 // pred_check
      _
    $region47: #{tpu_custom_call.1} parent=1 // pred_check_branch
      %119 = sbr.rel (0) target = $region49
    $region48: #{tpu_custom_call.1} parent=1 // pred_region
      %120 = dma.done [#allocation9], 24576
    $region49: #{tpu_custom_call.1} parent=1 // pred_fallthru
      _
    // Predicated region
    $region50: #{tpu_custom_call.1} parent=1 // pred_check
      _
    $region51: #{tpu_custom_call.1} parent=1 // pred_check_branch
      %122 = sbr.rel (0) target = $region53
    $region52: #{tpu_custom_call.1} parent=1 // pred_region
      %123 = dma.done [#allocation9], 6144
    $region53: #{tpu_custom_call.1} parent=1 // pred_fallthru
      _
    // Predicated region
    $region54: #{tpu_custom_call.1} parent=1 // pred_check
      _
    $region55: #{tpu_custom_call.1} parent=1 // pred_check_branch
      %125 = sbr.rel (0) target = $region57
    $region56: #{tpu_custom_call.1} parent=1 // pred_region
      %126 = dma.done [#allocation12], 12288
    $region57: #{tpu_custom_call.1} parent=1 // pred_fallthru
      _
    // Predicated region
    $region58: #{tpu_custom_call.1} parent=1 // pred_check
      _
    $region59: #{tpu_custom_call.1} parent=1 // pred_check_branch
      %128 = sbr.rel (0) target = $region61
    $region60: #{tpu_custom_call.1} parent=1 // pred_region
      %129 = dma.done [#allocation12], 4096
    $region61: #{tpu_custom_call.1} parent=1 // pred_fallthru
      _
    // Predicated region
    $region62: #{tpu_custom_call.1} parent=1 // pred_check
      _
    $region63: #{tpu_custom_call.1} parent=1 // pred_check_branch
      %131 = sbr.rel (0) target = $region65
    $region64: #{tpu_custom_call.1} parent=1 // pred_region
      %132 = dma.done [#allocation15], 512
    $region65: #{tpu_custom_call.1} parent=1 // pred_fallthru
      _
    %v133 = vld [vmem:[#allocation14] ss:$8 sm:$0xf]
    %s134 = scalar_lea.vmem [#allocation14], 1
    %v135 = vld [vmem:[%s134] ss:$8 sm:$0x7]
    %s136 = scalar_lea.vmem [#allocation14], 2
    %v137 = vld [vmem:[%s136] ss:$8 sm:$0x3]
    %v138 = vld [vmem:[#allocation14 + $0x3] ss:$0 sm:$0xff]
    %v139 = vld [vmem:[#allocation2] sm:$0xff]
    %v140 = vld [vmem:[#allocation7] sm:$0xff]
    %v141 = vld [vmem:[#allocation7 + $0x8] sm:$0xff]
    %v142 = vld [vmem:[#allocation7 + $0x10] sm:$0xff]
    %v143 = vld [vmem:[#allocation7 + $0x18] sm:$0xff]
    %v144 = vld [vmem:[#allocation7 + $0x20] sm:$0xff]
    %v145 = vld [vmem:[#allocation7 + $0x28] sm:$0xff]
    %v146 = vld [vmem:[#allocation7 + $0x30] sm:$0xff]
    %v147 = vld [vmem:[#allocation7 + $0x38] sm:$0xff]
    %v148 = vld [vmem:[#allocation7 + $0x40] sm:$0xff]
    %v149 = vld [vmem:[#allocation7 + $0x48] sm:$0xff]
    %v150 = vld [vmem:[#allocation7 + $0x50] sm:$0xff]
    %v151 = vld [vmem:[#allocation7 + $0x58] sm:$0xff]
    %v152 = vld [vmem:[#allocation7 + $0x60] sm:$0xff]
    %v153 = vld [vmem:[#allocation7 + $0x68] sm:$0xff]
    %v154 = vld [vmem:[#allocation7 + $0x70] sm:$0xff]
    %v155 = vld [vmem:[#allocation7 + $0x78] sm:$0xff]
    %v156 = vld [vmem:[#allocation7 + $0x80] sm:$0xff]
    %v157 = vld [vmem:[#allocation7 + $0x88] sm:$0xff]
    %v158 = vld [vmem:[#allocation7 + $0x90] sm:$0xff]
    %v159 = vld [vmem:[#allocation7 + $0x98] sm:$0xff]
    %v160 = vld [vmem:[#allocation7 + $0xa0] sm:$0xff]
    %v161 = vld [vmem:[#allocation7 + $0xa8] sm:$0xff]
    %v162 = vld [vmem:[#allocation7 + $0xb0] sm:$0xff]
    %v163 = vld [vmem:[#allocation7 + $0xb8] sm:$0xff]
    %v164 = vld [vmem:[#allocation7 + $0xc0] sm:$0xff]
    %v165 = vld [vmem:[#allocation7 + $0xc8] sm:$0xff]
    %v166 = vld [vmem:[#allocation7 + $0xd0] sm:$0xff]
    %v167 = vld [vmem:[#allocation7 + $0xd8] sm:$0xff]
    %v168 = vld [vmem:[#allocation7 + $0xe0] sm:$0xff]
    %v169 = vld [vmem:[#allocation7 + $0xe8] sm:$0xff]
    %v170 = vld [vmem:[#allocation7 + $0xf0] sm:$0xff]
    %v171 = vld [vmem:[#allocation7 + $0xf8] sm:$0xff]
    %v172 = vld [vmem:[#allocation7 + $0x100] sm:$0xff]
    %v173 = vld [vmem:[#allocation7 + $0x108] sm:$0xff]
    %v174 = vld [vmem:[#allocation7 + $0x110] sm:$0xff]
    %v175 = vld [vmem:[#allocation7 + $0x118] sm:$0xff]
    %v176 = vld [vmem:[#allocation7 + $0x120] sm:$0xff]
    %v177 = vld [vmem:[#allocation7 + $0x128] sm:$0xff]
    %v178 = vld [vmem:[#allocation7 + $0x130] sm:$0xff]
    %v179 = vld [vmem:[#allocation7 + $0x138] sm:$0xff]
    %v180 = vld [vmem:[#allocation7 + $0x140] sm:$0xff]
    %v181 = vld [vmem:[#allocation7 + $0x148] sm:$0xff]
    %v182 = vld [vmem:[#allocation7 + $0x150] sm:$0xff]
    %v183 = vld [vmem:[#allocation7 + $0x158] sm:$0xff]
    %v184 = vld [vmem:[#allocation7 + $0x160] sm:$0xff]
    %v185 = vld [vmem:[#allocation7 + $0x168] sm:$0xff]
    %v186 = vld [vmem:[#allocation7 + $0x170] sm:$0xff]
    %v187 = vld [vmem:[#allocation7 + $0x178] sm:$0xff]
    %v188 = vld [vmem:[#allocation7 + $0x180] sm:$0xff]
    %v189 = vld [vmem:[#allocation7 + $0x188] sm:$0xff]
    %v190 = vld [vmem:[#allocation7 + $0x190] sm:$0xff]
    %v191 = vld [vmem:[#allocation7 + $0x198] sm:$0xff]
    %v192 = vld [vmem:[#allocation7 + $0x1a0] sm:$0xff]
    %v193 = vld [vmem:[#allocation7 + $0x1a8] sm:$0xff]
    %v194 = vld [vmem:[#allocation7 + $0x1b0] sm:$0xff]
    %v195 = vld [vmem:[#allocation7 + $0x1b8] sm:$0xff]
    %v196 = vld [vmem:[#allocation7 + $0x1c0] sm:$0xff]
    %v197 = vld [vmem:[#allocation7 + $0x1c8] sm:$0xff]
    %v198 = vld [vmem:[#allocation7 + $0x1d0] sm:$0xff]
    %v199 = vld [vmem:[#allocation7 + $0x1d8] sm:$0xff]
    %v200 = vld [vmem:[#allocation7 + $0x1e0] sm:$0xff]
    %v201 = vld [vmem:[#allocation7 + $0x1e8] sm:$0xff]
    %v202 = vld [vmem:[#allocation7 + $0x1f0] sm:$0xff]
    %v203 = vld [vmem:[#allocation7 + $0x1f8] sm:$0xff]
    %v205 = vlaneseq
    %v206 = vshrl.u32 %v205, 7
    %v207 = vsub.s32 0, %v206
    %v208 = vrot.slane %v133, %v207
    %v209 = vlaneseq
    %v210 = vshrl.u32 %v209, 7
    %v211 = vsub.s32 1, %v210
    %v212 = vrot.slane %v133, %v211
    %v213 = vlaneseq
    %v214 = vshrl.u32 %v213, 7
    %v215 = vsub.s32 2, %v214
    %v216 = vrot.slane %v133, %v215
    %v217 = vlaneseq
    %v218 = vshrl.u32 %v217, 7
    %v219 = vsub.s32 3, %v218
    %v220 = vrot.slane %v133, %v219
    %225 = vmatprep.subr.mxu0 %v141
    %226 = vmatpush1.msra.mxu0 %v140
    %227 = vmatprep.subr.mxu0 %v145
    %228 = vmatpush1.msra.mxu0 %v144
    %229 = vmatprep.subr.mxu0 %v149
    %230 = vmatpush1.msra.mxu0 %v148
    %231 = vmatprep.subr.mxu0 %v153
    %232 = vmatpush1.msra.mxu0 %v152
    %233 = vmatprep.subr.mxu0 %v157
    %234 = vmatpush1.msra.mxu0 %v156
    %235 = vmatprep.subr.mxu0 %v161
    %236 = vmatpush1.msra.mxu0 %v160
    %237 = vmatprep.subr.mxu0 %v165
    %238 = vmatpush1.msra.mxu0 %v164
    %239 = vmatprep.subr.mxu0 %v169
    %240 = vmatpush1.msra.mxu0 %v168
    %241 = vmatprep.subr.mxu0 %v173
    %242 = vmatpush1.msra.mxu0 %v172
    %243 = vmatprep.subr.mxu0 %v177
    %244 = vmatpush1.msra.mxu0 %v176
    %245 = vmatprep.subr.mxu0 %v181
    %246 = vmatpush1.msra.mxu0 %v180
    %247 = vmatprep.subr.mxu0 %v185
    %248 = vmatpush1.msra.mxu0 %v184
    %249 = vmatprep.subr.mxu0 %v189
    %250 = vmatpush1.msra.mxu0 %v188
    %251 = vmatprep.subr.mxu0 %v193
    %252 = vmatpush1.msra.mxu0 %v192
    %253 = vmatprep.subr.mxu0 %v197
    %254 = vmatpush1.msra.mxu0 %v196
    %255 = vmatprep.subr.mxu0 %v201
    %256 = vmatpush1.msra.mxu0 %v200
    %257 = vmatprep.subr.mxu0 0.0
    %258 = vmatpush1.msra.mxu0 0.0
    %259 = vmatprep.subr.mxu0 0.0
    %260 = vmatpush1.msra.mxu0 0.0
    %261 = vmatprep.subr.mxu0 0.0
    %262 = vmatpush1.msra.mxu0 0.0
    %263 = vmatprep.subr.mxu0 0.0
    %264 = vmatpush1.msra.mxu0 0.0
    %265 = vmatprep.subr.mxu0 0.0
    %266 = vmatpush1.msra.mxu0 0.0
    %267 = vmatprep.subr.mxu0 0.0
    %268 = vmatpush1.msra.mxu0 0.0
    %269 = vmatprep.subr.mxu0 0.0
    %270 = vmatpush1.msra.mxu0 0.0
    %271 = vmatprep.subr.mxu0 0.0
    %272 = vmatpush1.msra.mxu0 0.0
    %273 = vmatprep.subr.mxu0 0.0
    %274 = vmatpush1.msra.mxu0 0.0
    %275 = vmatprep.subr.mxu0 0.0
    %276 = vmatpush1.msra.mxu0 0.0
    %277 = vmatprep.subr.mxu0 0.0
    %278 = vmatpush1.msra.mxu0 0.0
    %279 = vmatprep.subr.mxu0 0.0
    %280 = vmatpush1.msra.mxu0 0.0
    %281 = vmatprep.subr.mxu0 0.0
    %282 = vmatpush1.msra.mxu0 0.0
    %283 = vmatprep.subr.mxu0 0.0
    %284 = vmatpush1.msra.mxu0 0.0
    %285 = vmatprep.subr.mxu0 0.0
    %286 = vmatpush1.msra.mxu0 0.0
    %287 = vmatprep.subr.mxu0 0.0
    %288 = vmatpush1.msra.mxu0 0.0
    %289 = vmatprep.mubr.f32.mxu0 0.0
    %290 = vmatmul.mubr.f32.gmra.mrb[0].mxu0 %v139
    %v291 = vpop.f32.mrb[0].mxu0
    %v292 = vadd.f32 %v208, %v291
    %v293 = vpop.f32.mrb[0].mxu0
    %v294 = vadd.f32 %v212, %v293
    %295 = vdwg.mxu0
    %296 = vmatprep.subr.mxu0 %v143
    %297 = vmatpush1.msra.mxu0 %v142
    %298 = vmatprep.subr.mxu0 %v147
    %299 = vmatpush1.msra.mxu0 %v146
    %300 = vmatprep.subr.mxu0 %v151
    %301 = vmatpush1.msra.mxu0 %v150
    %302 = vmatprep.subr.mxu0 %v155
    %303 = vmatpush1.msra.mxu0 %v154
    %304 = vmatprep.subr.mxu0 %v159
    %305 = vmatpush1.msra.mxu0 %v158
    %306 = vmatprep.subr.mxu0 %v163
    %307 = vmatpush1.msra.mxu0 %v162
    %308 = vmatprep.subr.mxu0 %v167
    %309 = vmatpush1.msra.mxu0 %v166
    %310 = vmatprep.subr.mxu0 %v171
    %311 = vmatpush1.msra.mxu0 %v170
    %312 = vmatprep.subr.mxu0 %v175
    %313 = vmatpush1.msra.mxu0 %v174
    %314 = vmatprep.subr.mxu0 %v179
    %315 = vmatpush1.msra.mxu0 %v178
    %316 = vmatprep.subr.mxu0 %v183
    %317 = vmatpush1.msra.mxu0 %v182
    %318 = vmatprep.subr.mxu0 %v187
    %319 = vmatpush1.msra.mxu0 %v186
    %320 = vmatprep.subr.mxu0 %v191
    %321 = vmatpush1.msra.mxu0 %v190
    %322 = vmatprep.subr.mxu0 %v195
    %323 = vmatpush1.msra.mxu0 %v194
    %324 = vmatprep.subr.mxu0 %v199
    %325 = vmatpush1.msra.mxu0 %v198
    %326 = vmatprep.subr.mxu0 %v203
    %327 = vmatpush1.msra.mxu0 %v202
    %328 = vmatprep.subr.mxu0 0.0
    %329 = vmatpush1.msra.mxu0 0.0
    %330 = vmatprep.subr.mxu0 0.0
    %331 = vmatpush1.msra.mxu0 0.0
    %332 = vmatprep.subr.mxu0 0.0
    %333 = vmatpush1.msra.mxu0 0.0
    %334 = vmatprep.subr.mxu0 0.0
    %335 = vmatpush1.msra.mxu0 0.0
    %336 = vmatprep.subr.mxu0 0.0
    %337 = vmatpush1.msra.mxu0 0.0
    %338 = vmatprep.subr.mxu0 0.0
    %339 = vmatpush1.msra.mxu0 0.0
    %340 = vmatprep.subr.mxu0 0.0
    %341 = vmatpush1.msra.mxu0 0.0
    %342 = vmatprep.subr.mxu0 0.0
    %343 = vmatpush1.msra.mxu0 0.0
    %344 = vmatprep.subr.mxu0 0.0
    %345 = vmatpush1.msra.mxu0 0.0
    %346 = vmatprep.subr.mxu0 0.0
    %347 = vmatpush1.msra.mxu0 0.0
    %348 = vmatprep.subr.mxu0 0.0
    %349 = vmatpush1.msra.mxu0 0.0
    %350 = vmatprep.subr.mxu0 0.0
    %351 = vmatpush1.msra.mxu0 0.0
    %352 = vmatprep.subr.mxu0 0.0
    %353 = vmatpush1.msra.mxu0 0.0
    %354 = vmatprep.subr.mxu0 0.0
    %355 = vmatpush1.msra.mxu0 0.0
    %356 = vmatprep.subr.mxu0 0.0
    %357 = vmatpush1.msra.mxu0 0.0
    %358 = vmatprep.subr.mxu0 0.0
    %359 = vmatpush1.msra.mxu0 0.0
    %360 = vmatprep.mubr.f32.mxu0 0.0
    %361 = vmatmul.mubr.f32.gmra.mrb[0].mxu0 %v139
    %v362 = vpop.f32.mrb[0].mxu0
    %v363 = vadd.f32 %v216, %v362
    %v364 = vpop.f32.mrb[0].mxu0
    %v365 = vadd.f32 %v220, %v364
    %366 = vdwg.mxu0
    %v367 = vmax.f32 %v292, 0.0
    %v368 = vmax.f32 %v294, 0.0
    %v369 = vmax.f32 %v363, 0.0
    %v370 = vmax.f32 %v365, 0.0
    %v371 = vld [vmem:[#allocation8] sm:$0xff]
    %v372 = vld [vmem:[#allocation8 + $0x8] sm:$0xff]
    %v373 = vld [vmem:[#allocation8 + $0x10] sm:$0xff]
    %v374 = vld [vmem:[#allocation8 + $0x18] sm:$0xff]
    %v375 = vld [vmem:[#allocation8 + $0x20] sm:$0xff]
    %v376 = vld [vmem:[#allocation8 + $0x28] sm:$0xff]
    %v377 = vld [vmem:[#allocation8 + $0x30] sm:$0xff]
    %v378 = vld [vmem:[#allocation8 + $0x38] sm:$0xff]
    %v379 = vld [vmem:[#allocation8 + $0x40] sm:$0xff]
    %v380 = vld [vmem:[#allocation8 + $0x48] sm:$0xff]
    %v381 = vld [vmem:[#allocation8 + $0x50] sm:$0xff]
    %v382 = vld [vmem:[#allocation8 + $0x58] sm:$0xff]
    %v383 = vld [vmem:[#allocation8 + $0x60] sm:$0xff]
    %v384 = vld [vmem:[#allocation8 + $0x68] sm:$0xff]
    %v385 = vld [vmem:[#allocation8 + $0x70] sm:$0xff]
    %v386 = vld [vmem:[#allocation8 + $0x78] sm:$0xff]
    %v387 = vld [vmem:[#allocation8 + $0x80] sm:$0xff]
    %v388 = vld [vmem:[#allocation8 + $0x88] sm:$0xff]
    %v389 = vld [vmem:[#allocation8 + $0x90] sm:$0xff]
    %v390 = vld [vmem:[#allocation8 + $0x98] sm:$0xff]
    %v391 = vld [vmem:[#allocation8 + $0xa0] sm:$0xff]
    %v392 = vld [vmem:[#allocation8 + $0xa8] sm:$0xff]
    %v393 = vld [vmem:[#allocation8 + $0xb0] sm:$0xff]
    %v394 = vld [vmem:[#allocation8 + $0xb8] sm:$0xff]
    %v395 = vld [vmem:[#allocation8 + $0xc0] sm:$0xff]
    %v396 = vld [vmem:[#allocation8 + $0xc8] sm:$0xff]
    %v397 = vld [vmem:[#allocation8 + $0xd0] sm:$0xff]
    %v398 = vld [vmem:[#allocation8 + $0xd8] sm:$0xff]
    %v399 = vld [vmem:[#allocation8 + $0xe0] sm:$0xff]
    %v400 = vld [vmem:[#allocation8 + $0xe8] sm:$0xff]
    %v401 = vld [vmem:[#allocation8 + $0xf0] sm:$0xff]
    %v402 = vld [vmem:[#allocation8 + $0xf8] sm:$0xff]
    %v403 = vld [vmem:[#allocation8 + $0x100] sm:$0xff]
    %v404 = vld [vmem:[#allocation8 + $0x108] sm:$0xff]
    %v405 = vld [vmem:[#allocation8 + $0x110] sm:$0xff]
    %v406 = vld [vmem:[#allocation8 + $0x118] sm:$0xff]
    %v407 = vld [vmem:[#allocation8 + $0x120] sm:$0xff]
    %v408 = vld [vmem:[#allocation8 + $0x128] sm:$0xff]
    %v409 = vld [vmem:[#allocation8 + $0x130] sm:$0xff]
    %v410 = vld [vmem:[#allocation8 + $0x138] sm:$0xff]
    %v411 = vld [vmem:[#allocation8 + $0x140] sm:$0xff]
    %v412 = vld [vmem:[#allocation8 + $0x148] sm:$0xff]
    %v413 = vld [vmem:[#allocation8 + $0x150] sm:$0xff]
    %v414 = vld [vmem:[#allocation8 + $0x158] sm:$0xff]
    %v415 = vld [vmem:[#allocation8 + $0x160] sm:$0xff]
    %v416 = vld [vmem:[#allocation8 + $0x168] sm:$0xff]
    %v417 = vld [vmem:[#allocation8 + $0x170] sm:$0xff]
    %v418 = vld [vmem:[#allocation8 + $0x178] sm:$0xff]
    %v419 = vld [vmem:[#allocation8 + $0x180] sm:$0xff]
    %v420 = vld [vmem:[#allocation8 + $0x188] sm:$0xff]
    %v421 = vld [vmem:[#allocation8 + $0x190] sm:$0xff]
    %v422 = vld [vmem:[#allocation8 + $0x198] sm:$0xff]
    %v423 = vld [vmem:[#allocation8 + $0x1a0] sm:$0xff]
    %v424 = vld [vmem:[#allocation8 + $0x1a8] sm:$0xff]
    %v425 = vld [vmem:[#allocation8 + $0x1b0] sm:$0xff]
    %v426 = vld [vmem:[#allocation8 + $0x1b8] sm:$0xff]
    %v427 = vld [vmem:[#allocation8 + $0x1c0] sm:$0xff]
    %v428 = vld [vmem:[#allocation8 + $0x1c8] sm:$0xff]
    %v429 = vld [vmem:[#allocation8 + $0x1d0] sm:$0xff]
    %v430 = vld [vmem:[#allocation8 + $0x1d8] sm:$0xff]
    %v431 = vld [vmem:[#allocation8 + $0x1e0] sm:$0xff]
    %v432 = vld [vmem:[#allocation8 + $0x1e8] sm:$0xff]
    %v433 = vld [vmem:[#allocation8 + $0x1f0] sm:$0xff]
    %v434 = vld [vmem:[#allocation8 + $0x1f8] sm:$0xff]
    %v435 = vld [vmem:[#allocation8 + $0x200] sm:$0xff]
    %v436 = vld [vmem:[#allocation8 + $0x208] sm:$0xff]
    %v437 = vld [vmem:[#allocation8 + $0x210] sm:$0xff]
    %v438 = vld [vmem:[#allocation8 + $0x218] sm:$0xff]
    %v439 = vld [vmem:[#allocation8 + $0x220] sm:$0xff]
    %v440 = vld [vmem:[#allocation8 + $0x228] sm:$0xff]
    %v441 = vld [vmem:[#allocation8 + $0x230] sm:$0xff]
    %v442 = vld [vmem:[#allocation8 + $0x238] sm:$0xff]
    %v443 = vld [vmem:[#allocation8 + $0x240] sm:$0xff]
    %v444 = vld [vmem:[#allocation8 + $0x248] sm:$0xff]
    %v445 = vld [vmem:[#allocation8 + $0x250] sm:$0xff]
    %v446 = vld [vmem:[#allocation8 + $0x258] sm:$0xff]
    %v447 = vld [vmem:[#allocation8 + $0x260] sm:$0xff]
    %v448 = vld [vmem:[#allocation8 + $0x268] sm:$0xff]
    %v449 = vld [vmem:[#allocation8 + $0x270] sm:$0xff]
    %v450 = vld [vmem:[#allocation8 + $0x278] sm:$0xff]
    %v451 = vld [vmem:[#allocation8 + $0x280] sm:$0xff]
    %v452 = vld [vmem:[#allocation8 + $0x288] sm:$0xff]
    %v453 = vld [vmem:[#allocation8 + $0x290] sm:$0xff]
    %v454 = vld [vmem:[#allocation8 + $0x298] sm:$0xff]
    %v455 = vld [vmem:[#allocation8 + $0x2a0] sm:$0xff]
    %v456 = vld [vmem:[#allocation8 + $0x2a8] sm:$0xff]
    %v457 = vld [vmem:[#allocation8 + $0x2b0] sm:$0xff]
    %v458 = vld [vmem:[#allocation8 + $0x2b8] sm:$0xff]
    %v459 = vld [vmem:[#allocation8 + $0x2c0] sm:$0xff]
    %v460 = vld [vmem:[#allocation8 + $0x2c8] sm:$0xff]
    %v461 = vld [vmem:[#allocation8 + $0x2d0] sm:$0xff]
    %v462 = vld [vmem:[#allocation8 + $0x2d8] sm:$0xff]
    %v463 = vld [vmem:[#allocation8 + $0x2e0] sm:$0xff]
    %v464 = vld [vmem:[#allocation8 + $0x2e8] sm:$0xff]
    %v465 = vld [vmem:[#allocation8 + $0x2f0] sm:$0xff]
    %v466 = vld [vmem:[#allocation8 + $0x2f8] sm:$0xff]
    %v467 = vld [vmem:[#allocation8 + $0x300] sm:$0xff]
    %v468 = vld [vmem:[#allocation8 + $0x308] sm:$0xff]
    %v469 = vld [vmem:[#allocation8 + $0x310] sm:$0xff]
    %v470 = vld [vmem:[#allocation8 + $0x318] sm:$0xff]
    %v471 = vld [vmem:[#allocation8 + $0x320] sm:$0xff]
    %v472 = vld [vmem:[#allocation8 + $0x328] sm:$0xff]
    %v473 = vld [vmem:[#allocation8 + $0x330] sm:$0xff]
    %v474 = vld [vmem:[#allocation8 + $0x338] sm:$0xff]
    %v475 = vld [vmem:[#allocation8 + $0x340] sm:$0xff]
    %v476 = vld [vmem:[#allocation8 + $0x348] sm:$0xff]
    %v477 = vld [vmem:[#allocation8 + $0x350] sm:$0xff]
    %v478 = vld [vmem:[#allocation8 + $0x358] sm:$0xff]
    %v479 = vld [vmem:[#allocation8 + $0x360] sm:$0xff]
    %v480 = vld [vmem:[#allocation8 + $0x368] sm:$0xff]
    %v481 = vld [vmem:[#allocation8 + $0x370] sm:$0xff]
    %v482 = vld [vmem:[#allocation8 + $0x378] sm:$0xff]
    %v483 = vld [vmem:[#allocation8 + $0x380] sm:$0xff]
    %v484 = vld [vmem:[#allocation8 + $0x388] sm:$0xff]
    %v485 = vld [vmem:[#allocation8 + $0x390] sm:$0xff]
    %v486 = vld [vmem:[#allocation8 + $0x398] sm:$0xff]
    %v487 = vld [vmem:[#allocation8 + $0x3a0] sm:$0xff]
    %v488 = vld [vmem:[#allocation8 + $0x3a8] sm:$0xff]
    %v489 = vld [vmem:[#allocation8 + $0x3b0] sm:$0xff]
    %v490 = vld [vmem:[#allocation8 + $0x3b8] sm:$0xff]
    %v491 = vld [vmem:[#allocation8 + $0x3c0] sm:$0xff]
    %v492 = vld [vmem:[#allocation8 + $0x3c8] sm:$0xff]
    %v493 = vld [vmem:[#allocation8 + $0x3d0] sm:$0xff]
    %v494 = vld [vmem:[#allocation8 + $0x3d8] sm:$0xff]
    %v495 = vld [vmem:[#allocation8 + $0x3e0] sm:$0xff]
    %v496 = vld [vmem:[#allocation8 + $0x3e8] sm:$0xff]
    %v497 = vld [vmem:[#allocation8 + $0x3f0] sm:$0xff]
    %v498 = vld [vmem:[#allocation8 + $0x3f8] sm:$0xff]
    %v499 = vld [vmem:[#allocation8 + $0x400] sm:$0xff]
    %v500 = vld [vmem:[#allocation8 + $0x408] sm:$0xff]
    %v501 = vld [vmem:[#allocation8 + $0x410] sm:$0xff]
    %v502 = vld [vmem:[#allocation8 + $0x418] sm:$0xff]
    %v503 = vld [vmem:[#allocation8 + $0x420] sm:$0xff]
    %v504 = vld [vmem:[#allocation8 + $0x428] sm:$0xff]
    %v505 = vld [vmem:[#allocation8 + $0x430] sm:$0xff]
    %v506 = vld [vmem:[#allocation8 + $0x438] sm:$0xff]
    %v507 = vld [vmem:[#allocation8 + $0x440] sm:$0xff]
    %v508 = vld [vmem:[#allocation8 + $0x448] sm:$0xff]
    %v509 = vld [vmem:[#allocation8 + $0x450] sm:$0xff]
    %v510 = vld [vmem:[#allocation8 + $0x458] sm:$0xff]
    %v511 = vld [vmem:[#allocation8 + $0x460] sm:$0xff]
    %v512 = vld [vmem:[#allocation8 + $0x468] sm:$0xff]
    %v513 = vld [vmem:[#allocation8 + $0x470] sm:$0xff]
    %v514 = vld [vmem:[#allocation8 + $0x478] sm:$0xff]
    %v515 = vld [vmem:[#allocation8 + $0x480] sm:$0xff]
    %v516 = vld [vmem:[#allocation8 + $0x488] sm:$0xff]
    %v517 = vld [vmem:[#allocation8 + $0x490] sm:$0xff]
    %v518 = vld [vmem:[#allocation8 + $0x498] sm:$0xff]
    %v519 = vld [vmem:[#allocation8 + $0x4a0] sm:$0xff]
    %v520 = vld [vmem:[#allocation8 + $0x4a8] sm:$0xff]
    %v521 = vld [vmem:[#allocation8 + $0x4b0] sm:$0xff]
    %v522 = vld [vmem:[#allocation8 + $0x4b8] sm:$0xff]
    %v523 = vld [vmem:[#allocation8 + $0x4c0] sm:$0xff]
    %v524 = vld [vmem:[#allocation8 + $0x4c8] sm:$0xff]
    %v525 = vld [vmem:[#allocation8 + $0x4d0] sm:$0xff]
    %v526 = vld [vmem:[#allocation8 + $0x4d8] sm:$0xff]
    %v527 = vld [vmem:[#allocation8 + $0x4e0] sm:$0xff]
    %v528 = vld [vmem:[#allocation8 + $0x4e8] sm:$0xff]
    %v529 = vld [vmem:[#allocation8 + $0x4f0] sm:$0xff]
    %v530 = vld [vmem:[#allocation8 + $0x4f8] sm:$0xff]
    %v531 = vld [vmem:[#allocation8 + $0x500] sm:$0xff]
    %v532 = vld [vmem:[#allocation8 + $0x508] sm:$0xff]
    %v533 = vld [vmem:[#allocation8 + $0x510] sm:$0xff]
    %v534 = vld [vmem:[#allocation8 + $0x518] sm:$0xff]
    %v535 = vld [vmem:[#allocation8 + $0x520] sm:$0xff]
    %v536 = vld [vmem:[#allocation8 + $0x528] sm:$0xff]
    %v537 = vld [vmem:[#allocation8 + $0x530] sm:$0xff]
    %v538 = vld [vmem:[#allocation8 + $0x538] sm:$0xff]
    %v539 = vld [vmem:[#allocation8 + $0x540] sm:$0xff]
    %v540 = vld [vmem:[#allocation8 + $0x548] sm:$0xff]
    %v541 = vld [vmem:[#allocation8 + $0x550] sm:$0xff]
    %v542 = vld [vmem:[#allocation8 + $0x558] sm:$0xff]
    %v543 = vld [vmem:[#allocation8 + $0x560] sm:$0xff]
    %v544 = vld [vmem:[#allocation8 + $0x568] sm:$0xff]
    %v545 = vld [vmem:[#allocation8 + $0x570] sm:$0xff]
    %v546 = vld [vmem:[#allocation8 + $0x578] sm:$0xff]
    %v547 = vld [vmem:[#allocation8 + $0x580] sm:$0xff]
    %v548 = vld [vmem:[#allocation8 + $0x588] sm:$0xff]
    %v549 = vld [vmem:[#allocation8 + $0x590] sm:$0xff]
    %v550 = vld [vmem:[#allocation8 + $0x598] sm:$0xff]
    %v551 = vld [vmem:[#allocation8 + $0x5a0] sm:$0xff]
    %v552 = vld [vmem:[#allocation8 + $0x5a8] sm:$0xff]
    %v553 = vld [vmem:[#allocation8 + $0x5b0] sm:$0xff]
    %v554 = vld [vmem:[#allocation8 + $0x5b8] sm:$0xff]
    %v555 = vld [vmem:[#allocation8 + $0x5c0] sm:$0xff]
    %v556 = vld [vmem:[#allocation8 + $0x5c8] sm:$0xff]
    %v557 = vld [vmem:[#allocation8 + $0x5d0] sm:$0xff]
    %v558 = vld [vmem:[#allocation8 + $0x5d8] sm:$0xff]
    %v559 = vld [vmem:[#allocation8 + $0x5e0] sm:$0xff]
    %v560 = vld [vmem:[#allocation8 + $0x5e8] sm:$0xff]
    %v561 = vld [vmem:[#allocation8 + $0x5f0] sm:$0xff]
    %v562 = vld [vmem:[#allocation8 + $0x5f8] sm:$0xff]
    %v563 = vld [vmem:[#allocation5] sm:$0xff]
    %v564 = vld [vmem:[#allocation10] sm:$0xff]
    %v565 = vld [vmem:[#allocation10 + $0x8] sm:$0xff]
    %v566 = vld [vmem:[#allocation10 + $0x10] sm:$0xff]
    %v567 = vld [vmem:[#allocation10 + $0x18] sm:$0xff]
    %v568 = vld [vmem:[#allocation10 + $0x20] sm:$0xff]
    %v569 = vld [vmem:[#allocation10 + $0x28] sm:$0xff]
    %v570 = vld [vmem:[#allocation10 + $0x30] sm:$0xff]
    %v571 = vld [vmem:[#allocation10 + $0x38] sm:$0xff]
    %v572 = vld [vmem:[#allocation10 + $0x40] sm:$0xff]
    %v573 = vld [vmem:[#allocation10 + $0x48] sm:$0xff]
    %v574 = vld [vmem:[#allocation10 + $0x50] sm:$0xff]
    %v575 = vld [vmem:[#allocation10 + $0x58] sm:$0xff]
    %v576 = vld [vmem:[#allocation10 + $0x60] sm:$0xff]
    %v577 = vld [vmem:[#allocation10 + $0x68] sm:$0xff]
    %v578 = vld [vmem:[#allocation10 + $0x70] sm:$0xff]
    %v579 = vld [vmem:[#allocation10 + $0x78] sm:$0xff]
    %v580 = vld [vmem:[#allocation10 + $0x80] sm:$0xff]
    %v581 = vld [vmem:[#allocation10 + $0x88] sm:$0xff]
    %v582 = vld [vmem:[#allocation10 + $0x90] sm:$0xff]
    %v583 = vld [vmem:[#allocation10 + $0x98] sm:$0xff]
    %v584 = vld [vmem:[#allocation10 + $0xa0] sm:$0xff]
    %v585 = vld [vmem:[#allocation10 + $0xa8] sm:$0xff]
    %v586 = vld [vmem:[#allocation10 + $0xb0] sm:$0xff]
    %v587 = vld [vmem:[#allocation10 + $0xb8] sm:$0xff]
    %v588 = vld [vmem:[#allocation10 + $0xc0] sm:$0xff]
    %v589 = vld [vmem:[#allocation10 + $0xc8] sm:$0xff]
    %v590 = vld [vmem:[#allocation10 + $0xd0] sm:$0xff]
    %v591 = vld [vmem:[#allocation10 + $0xd8] sm:$0xff]
    %v592 = vld [vmem:[#allocation10 + $0xe0] sm:$0xff]
    %v593 = vld [vmem:[#allocation10 + $0xe8] sm:$0xff]
    %v594 = vld [vmem:[#allocation10 + $0xf0] sm:$0xff]
    %v595 = vld [vmem:[#allocation10 + $0xf8] sm:$0xff]
    %v596 = vld [vmem:[#allocation10 + $0x100] sm:$0xff]
    %v597 = vld [vmem:[#allocation10 + $0x108] sm:$0xff]
    %v598 = vld [vmem:[#allocation10 + $0x110] sm:$0xff]
    %v599 = vld [vmem:[#allocation10 + $0x118] sm:$0xff]
    %v600 = vld [vmem:[#allocation10 + $0x120] sm:$0xff]
    %v601 = vld [vmem:[#allocation10 + $0x128] sm:$0xff]
    %v602 = vld [vmem:[#allocation10 + $0x130] sm:$0xff]
    %v603 = vld [vmem:[#allocation10 + $0x138] sm:$0xff]
    %v604 = vld [vmem:[#allocation10 + $0x140] sm:$0xff]
    %v605 = vld [vmem:[#allocation10 + $0x148] sm:$0xff]
    %v606 = vld [vmem:[#allocation10 + $0x150] sm:$0xff]
    %v607 = vld [vmem:[#allocation10 + $0x158] sm:$0xff]
    %v608 = vld [vmem:[#allocation10 + $0x160] sm:$0xff]
    %v609 = vld [vmem:[#allocation10 + $0x168] sm:$0xff]
    %v610 = vld [vmem:[#allocation10 + $0x170] sm:$0xff]
    %v611 = vld [vmem:[#allocation10 + $0x178] sm:$0xff]
    %612 = vmatprep.subr.mxu0 %v565
    %613 = vmatpush1.msra.mxu0 %v564
    %614 = vmatprep.subr.mxu0 %v568
    %615 = vmatpush1.msra.mxu0 %v567
    %616 = vmatprep.subr.mxu0 %v571
    %617 = vmatpush1.msra.mxu0 %v570
    %618 = vmatprep.subr.mxu0 %v574
    %619 = vmatpush1.msra.mxu0 %v573
    %620 = vmatprep.subr.mxu0 %v577
    %621 = vmatpush1.msra.mxu0 %v576
    %622 = vmatprep.subr.mxu0 %v580
    %623 = vmatpush1.msra.mxu0 %v579
    %624 = vmatprep.subr.mxu0 %v583
    %625 = vmatpush1.msra.mxu0 %v582
    %626 = vmatprep.subr.mxu0 %v586
    %627 = vmatpush1.msra.mxu0 %v585
    %628 = vmatprep.subr.mxu0 %v589
    %629 = vmatpush1.msra.mxu0 %v588
    %630 = vmatprep.subr.mxu0 %v592
    %631 = vmatpush1.msra.mxu0 %v591
    %632 = vmatprep.subr.mxu0 %v595
    %633 = vmatpush1.msra.mxu0 %v594
    %634 = vmatprep.subr.mxu0 %v598
    %635 = vmatpush1.msra.mxu0 %v597
    %636 = vmatprep.subr.mxu0 %v601
    %637 = vmatpush1.msra.mxu0 %v600
    %638 = vmatprep.subr.mxu0 %v604
    %639 = vmatpush1.msra.mxu0 %v603
    %640 = vmatprep.subr.mxu0 %v607
    %641 = vmatpush1.msra.mxu0 %v606
    %642 = vmatprep.subr.mxu0 %v610
    %643 = vmatpush1.msra.mxu0 %v609
    %644 = vmatprep.subr.mxu0 0.0
    %645 = vmatpush1.msra.mxu0 0.0
    %646 = vmatprep.subr.mxu0 0.0
    %647 = vmatpush1.msra.mxu0 0.0
    %648 = vmatprep.subr.mxu0 0.0
    %649 = vmatpush1.msra.mxu0 0.0
    %650 = vmatprep.subr.mxu0 0.0
    %651 = vmatpush1.msra.mxu0 0.0
    %652 = vmatprep.subr.mxu0 0.0
    %653 = vmatpush1.msra.mxu0 0.0
    %654 = vmatprep.subr.mxu0 0.0
    %655 = vmatpush1.msra.mxu0 0.0
    %656 = vmatprep.subr.mxu0 0.0
    %657 = vmatpush1.msra.mxu0 0.0
    %658 = vmatprep.subr.mxu0 0.0
    %659 = vmatpush1.msra.mxu0 0.0
    %660 = vmatprep.subr.mxu0 0.0
    %661 = vmatpush1.msra.mxu0 0.0
    %662 = vmatprep.subr.mxu0 0.0
    %663 = vmatpush1.msra.mxu0 0.0
    %664 = vmatprep.subr.mxu0 0.0
    %665 = vmatpush1.msra.mxu0 0.0
    %666 = vmatprep.subr.mxu0 0.0
    %667 = vmatpush1.msra.mxu0 0.0
    %668 = vmatprep.subr.mxu0 0.0
    %669 = vmatpush1.msra.mxu0 0.0
    %670 = vmatprep.subr.mxu0 0.0
    %671 = vmatpush1.msra.mxu0 0.0
    %672 = vmatprep.subr.mxu0 0.0
    %673 = vmatpush1.msra.mxu0 0.0
    %674 = vmatprep.subr.mxu0 0.0
    %675 = vmatpush1.msra.mxu0 0.0
    %676 = vmatprep.mubr.f32.mxu0 0.0
    %677 = vmatmul.mubr.f32.gmra.mrb[0].mxu0 %v563
    %v678 = vpop.f32.mrb[0].mxu0
    %v679 = vadd.f32 0.0, %v678
    %v680 = vpop.f32.mrb[0].mxu0
    %v681 = vadd.f32 0.0, %v680
    %682 = vdwg.mxu0
    %683 = vmatprep.subr.mxu0 0.0
    %684 = vmatpush1.msra.mxu0 %v566
    %685 = vmatprep.subr.mxu0 0.0
    %686 = vmatpush1.msra.mxu0 %v569
    %687 = vmatprep.subr.mxu0 0.0
    %688 = vmatpush1.msra.mxu0 %v572
    %689 = vmatprep.subr.mxu0 0.0
    %690 = vmatpush1.msra.mxu0 %v575
    %691 = vmatprep.subr.mxu0 0.0
    %692 = vmatpush1.msra.mxu0 %v578
    %693 = vmatprep.subr.mxu0 0.0
    %694 = vmatpush1.msra.mxu0 %v581
    %695 = vmatprep.subr.mxu0 0.0
    %696 = vmatpush1.msra.mxu0 %v584
    %697 = vmatprep.subr.mxu0 0.0
    %698 = vmatpush1.msra.mxu0 %v587
    %699 = vmatprep.subr.mxu0 0.0
    %700 = vmatpush1.msra.mxu0 %v590
    %701 = vmatprep.subr.mxu0 0.0
    %702 = vmatpush1.msra.mxu0 %v593
    %703 = vmatprep.subr.mxu0 0.0
    %704 = vmatpush1.msra.mxu0 %v596
    %705 = vmatprep.subr.mxu0 0.0
    %706 = vmatpush1.msra.mxu0 %v599
    %707 = vmatprep.subr.mxu0 0.0
    %708 = vmatpush1.msra.mxu0 %v602
    %709 = vmatprep.subr.mxu0 0.0
    %710 = vmatpush1.msra.mxu0 %v605
    %711 = vmatprep.subr.mxu0 0.0
    %712 = vmatpush1.msra.mxu0 %v608
    %713 = vmatprep.subr.mxu0 0.0
    %714 = vmatpush1.msra.mxu0 %v611
    %715 = vmatprep.subr.mxu0 0.0
    %716 = vmatpush1.msra.mxu0 0.0
    %717 = vmatprep.subr.mxu0 0.0
    %718 = vmatpush1.msra.mxu0 0.0
    %719 = vmatprep.subr.mxu0 0.0
    %720 = vmatpush1.msra.mxu0 0.0
    %721 = vmatprep.subr.mxu0 0.0
    %722 = vmatpush1.msra.mxu0 0.0
    %723 = vmatprep.subr.mxu0 0.0
    %724 = vmatpush1.msra.mxu0 0.0
    %725 = vmatprep.subr.mxu0 0.0
    %726 = vmatpush1.msra.mxu0 0.0
    %727 = vmatprep.subr.mxu0 0.0
    %728 = vmatpush1.msra.mxu0 0.0
    %729 = vmatprep.subr.mxu0 0.0
    %730 = vmatpush1.msra.mxu0 0.0
    %731 = vmatprep.subr.mxu0 0.0
    %732 = vmatpush1.msra.mxu0 0.0
    %733 = vmatprep.subr.mxu0 0.0
    %734 = vmatpush1.msra.mxu0 0.0
    %735 = vmatprep.subr.mxu0 0.0
    %736 = vmatpush1.msra.mxu0 0.0
    %737 = vmatprep.subr.mxu0 0.0
    %738 = vmatpush1.msra.mxu0 0.0
    %739 = vmatprep.subr.mxu0 0.0
    %740 = vmatpush1.msra.mxu0 0.0
    %741 = vmatprep.subr.mxu0 0.0
    %742 = vmatpush1.msra.mxu0 0.0
    %743 = vmatprep.subr.mxu0 0.0
    %744 = vmatpush1.msra.mxu0 0.0
    %745 = vmatprep.subr.mxu0 0.0
    %746 = vmatpush1.msra.mxu0 0.0
    %747 = vmatprep.mubr.f32.mxu0 0.0
    %748 = vmatmul.mubr.f32.gmra.mrb[0].mxu0 %v563
    %v749 = vpop.f32.mrb[0].mxu0
    %v750 = vadd.f32 0.0, %v749
    %v751 = vpop.f32.mrb[0].mxu0
    %752 = vdwg.mxu0
    %753 = vmatprep.subr.mxu0 %v372
    %754 = vmatpush1.msra.mxu0 %v371
    %755 = vmatprep.subr.mxu0 %v375
    %756 = vmatpush1.msra.mxu0 %v374
    %757 = vmatprep.subr.mxu0 %v378
    %758 = vmatpush1.msra.mxu0 %v377
    %759 = vmatprep.subr.mxu0 %v381
    %760 = vmatpush1.msra.mxu0 %v380
    %761 = vmatprep.subr.mxu0 %v384
    %762 = vmatpush1.msra.mxu0 %v383
    %763 = vmatprep.subr.mxu0 %v387
    %764 = vmatpush1.msra.mxu0 %v386
    %765 = vmatprep.subr.mxu0 %v390
    %766 = vmatpush1.msra.mxu0 %v389
    %767 = vmatprep.subr.mxu0 %v393
    %768 = vmatpush1.msra.mxu0 %v392
    %769 = vmatprep.subr.mxu0 %v396
    %770 = vmatpush1.msra.mxu0 %v395
    %771 = vmatprep.subr.mxu0 %v399
    %772 = vmatpush1.msra.mxu0 %v398
    %773 = vmatprep.subr.mxu0 %v402
    %774 = vmatpush1.msra.mxu0 %v401
    %775 = vmatprep.subr.mxu0 %v405
    %776 = vmatpush1.msra.mxu0 %v404
    %777 = vmatprep.subr.mxu0 %v408
    %778 = vmatpush1.msra.mxu0 %v407
    %779 = vmatprep.subr.mxu0 %v411
    %780 = vmatpush1.msra.mxu0 %v410
    %781 = vmatprep.subr.mxu0 %v414
    %782 = vmatpush1.msra.mxu0 %v413
    %783 = vmatprep.subr.mxu0 %v417
    %784 = vmatpush1.msra.mxu0 %v416
    %785 = vmatprep.subr.mxu0 %v420
    %786 = vmatpush1.msra.mxu0 %v419
    %787 = vmatprep.subr.mxu0 %v423
    %788 = vmatpush1.msra.mxu0 %v422
    %789 = vmatprep.subr.mxu0 %v426
    %790 = vmatpush1.msra.mxu0 %v425
    %791 = vmatprep.subr.mxu0 %v429
    %792 = vmatpush1.msra.mxu0 %v428
    %793 = vmatprep.subr.mxu0 %v432
    %794 = vmatpush1.msra.mxu0 %v431
    %795 = vmatprep.subr.mxu0 %v435
    %796 = vmatpush1.msra.mxu0 %v434
    %797 = vmatprep.subr.mxu0 %v438
    %798 = vmatpush1.msra.mxu0 %v437
    %799 = vmatprep.subr.mxu0 %v441
    %800 = vmatpush1.msra.mxu0 %v440
    %801 = vmatprep.subr.mxu0 %v444
    %802 = vmatpush1.msra.mxu0 %v443
    %803 = vmatprep.subr.mxu0 %v447
    %804 = vmatpush1.msra.mxu0 %v446
    %805 = vmatprep.subr.mxu0 %v450
    %806 = vmatpush1.msra.mxu0 %v449
    %807 = vmatprep.subr.mxu0 %v453
    %808 = vmatpush1.msra.mxu0 %v452
    %809 = vmatprep.subr.mxu0 %v456
    %810 = vmatpush1.msra.mxu0 %v455
    %811 = vmatprep.subr.mxu0 %v459
    %812 = vmatpush1.msra.mxu0 %v458
    %813 = vmatprep.subr.mxu0 %v462
    %814 = vmatpush1.msra.mxu0 %v461
    %815 = vmatprep.subr.mxu0 %v465
    %816 = vmatpush1.msra.mxu0 %v464
    %817 = vmatprep.mubr.f32.mxu0 %v368
    %818 = vmatmul.mubr.f32.gmra.mrb[0].mxu0 %v367
    %v819 = vpop.f32.mrb[0].mxu0
    %v820 = vadd.f32 %v679, %v819
    %v821 = vpop.f32.mrb[0].mxu0
    %v822 = vadd.f32 %v681, %v821
    %823 = vdwg.mxu0
    %824 = vmatprep.subr.mxu0 %v468
    %825 = vmatpush1.msra.mxu0 %v467
    %826 = vmatprep.subr.mxu0 %v471
    %827 = vmatpush1.msra.mxu0 %v470
    %828 = vmatprep.subr.mxu0 %v474
    %829 = vmatpush1.msra.mxu0 %v473
    %830 = vmatprep.subr.mxu0 %v477
    %831 = vmatpush1.msra.mxu0 %v476
    %832 = vmatprep.subr.mxu0 %v480
    %833 = vmatpush1.msra.mxu0 %v479
    %834 = vmatprep.subr.mxu0 %v483
    %835 = vmatpush1.msra.mxu0 %v482
    %836 = vmatprep.subr.mxu0 %v486
    %837 = vmatpush1.msra.mxu0 %v485
    %838 = vmatprep.subr.mxu0 %v489
    %839 = vmatpush1.msra.mxu0 %v488
    %840 = vmatprep.subr.mxu0 %v492
    %841 = vmatpush1.msra.mxu0 %v491
    %842 = vmatprep.subr.mxu0 %v495
    %843 = vmatpush1.msra.mxu0 %v494
    %844 = vmatprep.subr.mxu0 %v498
    %845 = vmatpush1.msra.mxu0 %v497
    %846 = vmatprep.subr.mxu0 %v501
    %847 = vmatpush1.msra.mxu0 %v500
    %848 = vmatprep.subr.mxu0 %v504
    %849 = vmatpush1.msra.mxu0 %v503
    %850 = vmatprep.subr.mxu0 %v507
    %851 = vmatpush1.msra.mxu0 %v506
    %852 = vmatprep.subr.mxu0 %v510
    %853 = vmatpush1.msra.mxu0 %v509
    %854 = vmatprep.subr.mxu0 %v513
    %855 = vmatpush1.msra.mxu0 %v512
    %856 = vmatprep.subr.mxu0 %v516
    %857 = vmatpush1.msra.mxu0 %v515
    %858 = vmatprep.subr.mxu0 %v519
    %859 = vmatpush1.msra.mxu0 %v518
    %860 = vmatprep.subr.mxu0 %v522
    %861 = vmatpush1.msra.mxu0 %v521
    %862 = vmatprep.subr.mxu0 %v525
    %863 = vmatpush1.msra.mxu0 %v524
    %864 = vmatprep.subr.mxu0 %v528
    %865 = vmatpush1.msra.mxu0 %v527
    %866 = vmatprep.subr.mxu0 %v531
    %867 = vmatpush1.msra.mxu0 %v530
    %868 = vmatprep.subr.mxu0 %v534
    %869 = vmatpush1.msra.mxu0 %v533
    %870 = vmatprep.subr.mxu0 %v537
    %871 = vmatpush1.msra.mxu0 %v536
    %872 = vmatprep.subr.mxu0 %v540
    %873 = vmatpush1.msra.mxu0 %v539
    %874 = vmatprep.subr.mxu0 %v543
    %875 = vmatpush1.msra.mxu0 %v542
    %876 = vmatprep.subr.mxu0 %v546
    %877 = vmatpush1.msra.mxu0 %v545
    %878 = vmatprep.subr.mxu0 %v549
    %879 = vmatpush1.msra.mxu0 %v548
    %880 = vmatprep.subr.mxu0 %v552
    %881 = vmatpush1.msra.mxu0 %v551
    %882 = vmatprep.subr.mxu0 %v555
    %883 = vmatpush1.msra.mxu0 %v554
    %884 = vmatprep.subr.mxu0 %v558
    %885 = vmatpush1.msra.mxu0 %v557
    %886 = vmatprep.subr.mxu0 %v561
    %887 = vmatpush1.msra.mxu0 %v560
    %888 = vmatprep.mubr.f32.mxu0 %v370
    %889 = vmatmul.mubr.f32.gmra.mrb[0].mxu0 %v369
    %v890 = vpop.f32.mrb[0].mxu0
    %v891 = vadd.f32 %v820, %v890
    %v892 = vpop.f32.mrb[0].mxu0
    %v893 = vadd.f32 %v822, %v892
    %894 = vdwg.mxu0
    %895 = vmatprep.subr.mxu0 0.0
    %896 = vmatpush1.msra.mxu0 %v373
    %897 = vmatprep.subr.mxu0 0.0
    %898 = vmatpush1.msra.mxu0 %v376
    %899 = vmatprep.subr.mxu0 0.0
    %900 = vmatpush1.msra.mxu0 %v379
    %901 = vmatprep.subr.mxu0 0.0
    %902 = vmatpush1.msra.mxu0 %v382
    %903 = vmatprep.subr.mxu0 0.0
    %904 = vmatpush1.msra.mxu0 %v385
    %905 = vmatprep.subr.mxu0 0.0
    %906 = vmatpush1.msra.mxu0 %v388
    %907 = vmatprep.subr.mxu0 0.0
    %908 = vmatpush1.msra.mxu0 %v391
    %909 = vmatprep.subr.mxu0 0.0
    %910 = vmatpush1.msra.mxu0 %v394
    %911 = vmatprep.subr.mxu0 0.0
    %912 = vmatpush1.msra.mxu0 %v397
    %913 = vmatprep.subr.mxu0 0.0
    %914 = vmatpush1.msra.mxu0 %v400
    %915 = vmatprep.subr.mxu0 0.0
    %916 = vmatpush1.msra.mxu0 %v403
    %917 = vmatprep.subr.mxu0 0.0
    %918 = vmatpush1.msra.mxu0 %v406
    %919 = vmatprep.subr.mxu0 0.0
    %920 = vmatpush1.msra.mxu0 %v409
    %921 = vmatprep.subr.mxu0 0.0
    %922 = vmatpush1.msra.mxu0 %v412
    %923 = vmatprep.subr.mxu0 0.0
    %924 = vmatpush1.msra.mxu0 %v415
    %925 = vmatprep.subr.mxu0 0.0
    %926 = vmatpush1.msra.mxu0 %v418
    %927 = vmatprep.subr.mxu0 0.0
    %928 = vmatpush1.msra.mxu0 %v421
    %929 = vmatprep.subr.mxu0 0.0
    %930 = vmatpush1.msra.mxu0 %v424
    %931 = vmatprep.subr.mxu0 0.0
    %932 = vmatpush1.msra.mxu0 %v427
    %933 = vmatprep.subr.mxu0 0.0
    %934 = vmatpush1.msra.mxu0 %v430
    %935 = vmatprep.subr.mxu0 0.0
    %936 = vmatpush1.msra.mxu0 %v433
    %937 = vmatprep.subr.mxu0 0.0
    %938 = vmatpush1.msra.mxu0 %v436
    %939 = vmatprep.subr.mxu0 0.0
    %940 = vmatpush1.msra.mxu0 %v439
    %941 = vmatprep.subr.mxu0 0.0
    %942 = vmatpush1.msra.mxu0 %v442
    %943 = vmatprep.subr.mxu0 0.0
    %944 = vmatpush1.msra.mxu0 %v445
    %945 = vmatprep.subr.mxu0 0.0
    %946 = vmatpush1.msra.mxu0 %v448
    %947 = vmatprep.subr.mxu0 0.0
    %948 = vmatpush1.msra.mxu0 %v451
    %949 = vmatprep.subr.mxu0 0.0
    %950 = vmatpush1.msra.mxu0 %v454
    %951 = vmatprep.subr.mxu0 0.0
    %952 = vmatpush1.msra.mxu0 %v457
    %953 = vmatprep.subr.mxu0 0.0
    %954 = vmatpush1.msra.mxu0 %v460
    %955 = vmatprep.subr.mxu0 0.0
    %956 = vmatpush1.msra.mxu0 %v463
    %957 = vmatprep.subr.mxu0 0.0
    %958 = vmatpush1.msra.mxu0 %v466
    %959 = vmatprep.mubr.f32.mxu0 %v368
    %960 = vmatmul.mubr.f32.gmra.mrb[0].mxu0 %v367
    %v961 = vpop.f32.mrb[0].mxu0
    %v962 = vadd.f32 %v750, %v961
    %v963 = vpop.f32.mrb[0].mxu0
    %964 = vdwg.mxu0
    %965 = vmatprep.subr.mxu0 0.0
    %966 = vmatpush1.msra.mxu0 %v469
    %967 = vmatprep.subr.mxu0 0.0
    %968 = vmatpush1.msra.mxu0 %v472
    %969 = vmatprep.subr.mxu0 0.0
    %970 = vmatpush1.msra.mxu0 %v475
    %971 = vmatprep.subr.mxu0 0.0
    %972 = vmatpush1.msra.mxu0 %v478
    %973 = vmatprep.subr.mxu0 0.0
    %974 = vmatpush1.msra.mxu0 %v481
    %975 = vmatprep.subr.mxu0 0.0
    %976 = vmatpush1.msra.mxu0 %v484
    %977 = vmatprep.subr.mxu0 0.0
    %978 = vmatpush1.msra.mxu0 %v487
    %979 = vmatprep.subr.mxu0 0.0
    %980 = vmatpush1.msra.mxu0 %v490
    %981 = vmatprep.subr.mxu0 0.0
    %982 = vmatpush1.msra.mxu0 %v493
    %983 = vmatprep.subr.mxu0 0.0
    %984 = vmatpush1.msra.mxu0 %v496
    %985 = vmatprep.subr.mxu0 0.0
    %986 = vmatpush1.msra.mxu0 %v499
    %987 = vmatprep.subr.mxu0 0.0
    %988 = vmatpush1.msra.mxu0 %v502
    %989 = vmatprep.subr.mxu0 0.0
    %990 = vmatpush1.msra.mxu0 %v505
    %991 = vmatprep.subr.mxu0 0.0
    %992 = vmatpush1.msra.mxu0 %v508
    %993 = vmatprep.subr.mxu0 0.0
    %994 = vmatpush1.msra.mxu0 %v511
    %995 = vmatprep.subr.mxu0 0.0
    %996 = vmatpush1.msra.mxu0 %v514
    %997 = vmatprep.subr.mxu0 0.0
    %998 = vmatpush1.msra.mxu0 %v517
    %999 = vmatprep.subr.mxu0 0.0
    %1000 = vmatpush1.msra.mxu0 %v520
    %1001 = vmatprep.subr.mxu0 0.0
    %1002 = vmatpush1.msra.mxu0 %v523
    %1003 = vmatprep.subr.mxu0 0.0
    %1004 = vmatpush1.msra.mxu0 %v526
    %1005 = vmatprep.subr.mxu0 0.0
    %1006 = vmatpush1.msra.mxu0 %v529
    %1007 = vmatprep.subr.mxu0 0.0
    %1008 = vmatpush1.msra.mxu0 %v532
    %1009 = vmatprep.subr.mxu0 0.0
    %1010 = vmatpush1.msra.mxu0 %v535
    %1011 = vmatprep.subr.mxu0 0.0
    %1012 = vmatpush1.msra.mxu0 %v538
    %1013 = vmatprep.subr.mxu0 0.0
    %1014 = vmatpush1.msra.mxu0 %v541
    %1015 = vmatprep.subr.mxu0 0.0
    %1016 = vmatpush1.msra.mxu0 %v544
    %1017 = vmatprep.subr.mxu0 0.0
    %1018 = vmatpush1.msra.mxu0 %v547
    %1019 = vmatprep.subr.mxu0 0.0
    %1020 = vmatpush1.msra.mxu0 %v550
    %1021 = vmatprep.subr.mxu0 0.0
    %1022 = vmatpush1.msra.mxu0 %v553
    %1023 = vmatprep.subr.mxu0 0.0
    %1024 = vmatpush1.msra.mxu0 %v556
    %1025 = vmatprep.subr.mxu0 0.0
    %1026 = vmatpush1.msra.mxu0 %v559
    %1027 = vmatprep.subr.mxu0 0.0
    %1028 = vmatpush1.msra.mxu0 %v562
    %1029 = vmatprep.mubr.f32.mxu0 %v370
    %1030 = vmatmul.mubr.f32.gmra.mrb[0].mxu0 %v369
    %v1031 = vpop.f32.mrb[0].mxu0
    %v1032 = vadd.f32 %v962, %v1031
    %v1033 = vpop.f32.mrb[0].mxu0
    %1034 = vdwg.mxu0
    %v1036 = vlaneseq
    %v1037 = vshrl.u32 %v1036, 7
    %v1038 = vsub.s32 0, %v1037
    %v1039 = vrot.slane %v135, %v1038
    %v1040 = vlaneseq
    %v1041 = vshrl.u32 %v1040, 7
    %v1042 = vsub.s32 1, %v1041
    %v1043 = vrot.slane %v135, %v1042
    %v1044 = vlaneseq
    %v1045 = vshrl.u32 %v1044, 7
    %v1046 = vsub.s32 2, %v1045
    %v1047 = vrot.slane %v135, %v1046
    %v1051 = vadd.f32 %v891, %v1039
    %v1052 = vadd.f32 %v893, %v1043
    %v1053 = vadd.f32 %v1032, %v1047
    %v1054 = vmax.f32 %v1051, 0.0
    %v1055 = vmax.f32 %v1052, 0.0
    %v1056 = vmax.f32 %v1053, 0.0
    %v1057 = vld [vmem:[#allocation11] sm:$0xff]
    %v1058 = vld [vmem:[#allocation11 + $0x8] sm:$0xff]
    %v1059 = vld [vmem:[#allocation11 + $0x10] sm:$0xff]
    %v1060 = vld [vmem:[#allocation11 + $0x18] sm:$0xff]
    %v1061 = vld [vmem:[#allocation11 + $0x20] sm:$0xff]
    %v1062 = vld [vmem:[#allocation11 + $0x28] sm:$0xff]
    %v1063 = vld [vmem:[#allocation11 + $0x30] sm:$0xff]
    %v1064 = vld [vmem:[#allocation11 + $0x38] sm:$0xff]
    %v1065 = vld [vmem:[#allocation11 + $0x40] sm:$0xff]
    %v1066 = vld [vmem:[#allocation11 + $0x48] sm:$0xff]
    %v1067 = vld [vmem:[#allocation11 + $0x50] sm:$0xff]
    %v1068 = vld [vmem:[#allocation11 + $0x58] sm:$0xff]
    %v1069 = vld [vmem:[#allocation11 + $0x60] sm:$0xff]
    %v1070 = vld [vmem:[#allocation11 + $0x68] sm:$0xff]
    %v1071 = vld [vmem:[#allocation11 + $0x70] sm:$0xff]
    %v1072 = vld [vmem:[#allocation11 + $0x78] sm:$0xff]
    %v1073 = vld [vmem:[#allocation11 + $0x80] sm:$0xff]
    %v1074 = vld [vmem:[#allocation11 + $0x88] sm:$0xff]
    %v1075 = vld [vmem:[#allocation11 + $0x90] sm:$0xff]
    %v1076 = vld [vmem:[#allocation11 + $0x98] sm:$0xff]
    %v1077 = vld [vmem:[#allocation11 + $0xa0] sm:$0xff]
    %v1078 = vld [vmem:[#allocation11 + $0xa8] sm:$0xff]
    %v1079 = vld [vmem:[#allocation11 + $0xb0] sm:$0xff]
    %v1080 = vld [vmem:[#allocation11 + $0xb8] sm:$0xff]
    %v1081 = vld [vmem:[#allocation11 + $0xc0] sm:$0xff]
    %v1082 = vld [vmem:[#allocation11 + $0xc8] sm:$0xff]
    %v1083 = vld [vmem:[#allocation11 + $0xd0] sm:$0xff]
    %v1084 = vld [vmem:[#allocation11 + $0xd8] sm:$0xff]
    %v1085 = vld [vmem:[#allocation11 + $0xe0] sm:$0xff]
    %v1086 = vld [vmem:[#allocation11 + $0xe8] sm:$0xff]
    %v1087 = vld [vmem:[#allocation11 + $0xf0] sm:$0xff]
    %v1088 = vld [vmem:[#allocation11 + $0xf8] sm:$0xff]
    %v1089 = vld [vmem:[#allocation11 + $0x100] sm:$0xff]
    %v1090 = vld [vmem:[#allocation11 + $0x108] sm:$0xff]
    %v1091 = vld [vmem:[#allocation11 + $0x110] sm:$0xff]
    %v1092 = vld [vmem:[#allocation11 + $0x118] sm:$0xff]
    %v1093 = vld [vmem:[#allocation11 + $0x120] sm:$0xff]
    %v1094 = vld [vmem:[#allocation11 + $0x128] sm:$0xff]
    %v1095 = vld [vmem:[#allocation11 + $0x130] sm:$0xff]
    %v1096 = vld [vmem:[#allocation11 + $0x138] sm:$0xff]
    %v1097 = vld [vmem:[#allocation11 + $0x140] sm:$0xff]
    %v1098 = vld [vmem:[#allocation11 + $0x148] sm:$0xff]
    %v1099 = vld [vmem:[#allocation11 + $0x150] sm:$0xff]
    %v1100 = vld [vmem:[#allocation11 + $0x158] sm:$0xff]
    %v1101 = vld [vmem:[#allocation11 + $0x160] sm:$0xff]
    %v1102 = vld [vmem:[#allocation11 + $0x168] sm:$0xff]
    %v1103 = vld [vmem:[#allocation11 + $0x170] sm:$0xff]
    %v1104 = vld [vmem:[#allocation11 + $0x178] sm:$0xff]
    %v1105 = vld [vmem:[#allocation11 + $0x180] sm:$0xff]
    %v1106 = vld [vmem:[#allocation11 + $0x188] sm:$0xff]
    %v1107 = vld [vmem:[#allocation11 + $0x190] sm:$0xff]
    %v1108 = vld [vmem:[#allocation11 + $0x198] sm:$0xff]
    %v1109 = vld [vmem:[#allocation11 + $0x1a0] sm:$0xff]
    %v1110 = vld [vmem:[#allocation11 + $0x1a8] sm:$0xff]
    %v1111 = vld [vmem:[#allocation11 + $0x1b0] sm:$0xff]
    %v1112 = vld [vmem:[#allocation11 + $0x1b8] sm:$0xff]
    %v1113 = vld [vmem:[#allocation11 + $0x1c0] sm:$0xff]
    %v1114 = vld [vmem:[#allocation11 + $0x1c8] sm:$0xff]
    %v1115 = vld [vmem:[#allocation11 + $0x1d0] sm:$0xff]
    %v1116 = vld [vmem:[#allocation11 + $0x1d8] sm:$0xff]
    %v1117 = vld [vmem:[#allocation11 + $0x1e0] sm:$0xff]
    %v1118 = vld [vmem:[#allocation11 + $0x1e8] sm:$0xff]
    %v1119 = vld [vmem:[#allocation11 + $0x1f0] sm:$0xff]
    %v1120 = vld [vmem:[#allocation11 + $0x1f8] sm:$0xff]
    %v1121 = vld [vmem:[#allocation11 + $0x200] sm:$0xff]
    %v1122 = vld [vmem:[#allocation11 + $0x208] sm:$0xff]
    %v1123 = vld [vmem:[#allocation11 + $0x210] sm:$0xff]
    %v1124 = vld [vmem:[#allocation11 + $0x218] sm:$0xff]
    %v1125 = vld [vmem:[#allocation11 + $0x220] sm:$0xff]
    %v1126 = vld [vmem:[#allocation11 + $0x228] sm:$0xff]
    %v1127 = vld [vmem:[#allocation11 + $0x230] sm:$0xff]
    %v1128 = vld [vmem:[#allocation11 + $0x238] sm:$0xff]
    %v1129 = vld [vmem:[#allocation11 + $0x240] sm:$0xff]
    %v1130 = vld [vmem:[#allocation11 + $0x248] sm:$0xff]
    %v1131 = vld [vmem:[#allocation11 + $0x250] sm:$0xff]
    %v1132 = vld [vmem:[#allocation11 + $0x258] sm:$0xff]
    %v1133 = vld [vmem:[#allocation11 + $0x260] sm:$0xff]
    %v1134 = vld [vmem:[#allocation11 + $0x268] sm:$0xff]
    %v1135 = vld [vmem:[#allocation11 + $0x270] sm:$0xff]
    %v1136 = vld [vmem:[#allocation11 + $0x278] sm:$0xff]
    %v1137 = vld [vmem:[#allocation11 + $0x280] sm:$0xff]
    %v1138 = vld [vmem:[#allocation11 + $0x288] sm:$0xff]
    %v1139 = vld [vmem:[#allocation11 + $0x290] sm:$0xff]
    %v1140 = vld [vmem:[#allocation11 + $0x298] sm:$0xff]
    %v1141 = vld [vmem:[#allocation11 + $0x2a0] sm:$0xff]
    %v1142 = vld [vmem:[#allocation11 + $0x2a8] sm:$0xff]
    %v1143 = vld [vmem:[#allocation11 + $0x2b0] sm:$0xff]
    %v1144 = vld [vmem:[#allocation11 + $0x2b8] sm:$0xff]
    %v1145 = vld [vmem:[#allocation11 + $0x2c0] sm:$0xff]
    %v1146 = vld [vmem:[#allocation11 + $0x2c8] sm:$0xff]
    %v1147 = vld [vmem:[#allocation11 + $0x2d0] sm:$0xff]
    %v1148 = vld [vmem:[#allocation11 + $0x2d8] sm:$0xff]
    %v1149 = vld [vmem:[#allocation11 + $0x2e0] sm:$0xff]
    %v1150 = vld [vmem:[#allocation11 + $0x2e8] sm:$0xff]
    %v1151 = vld [vmem:[#allocation11 + $0x2f0] sm:$0xff]
    %v1152 = vld [vmem:[#allocation11 + $0x2f8] sm:$0xff]
    %v1154 = vlaneseq
    %v1155 = vshrl.u32 %v1154, 7
    %v1156 = vsub.s32 0, %v1155
    %v1157 = vrot.slane %v137, %v1156
    %v1158 = vlaneseq
    %v1159 = vshrl.u32 %v1158, 7
    %v1160 = vsub.s32 1, %v1159
    %v1161 = vrot.slane %v137, %v1160
    %1164 = vmatprep.subr.mxu0 %v1058
    %1165 = vmatpush1.msra.mxu0 %v1057
    %1166 = vmatprep.subr.mxu0 %v1060
    %1167 = vmatpush1.msra.mxu0 %v1059
    %1168 = vmatprep.subr.mxu0 %v1062
    %1169 = vmatpush1.msra.mxu0 %v1061
    %1170 = vmatprep.subr.mxu0 %v1064
    %1171 = vmatpush1.msra.mxu0 %v1063
    %1172 = vmatprep.subr.mxu0 %v1066
    %1173 = vmatpush1.msra.mxu0 %v1065
    %1174 = vmatprep.subr.mxu0 %v1068
    %1175 = vmatpush1.msra.mxu0 %v1067
    %1176 = vmatprep.subr.mxu0 %v1070
    %1177 = vmatpush1.msra.mxu0 %v1069
    %1178 = vmatprep.subr.mxu0 %v1072
    %1179 = vmatpush1.msra.mxu0 %v1071
    %1180 = vmatprep.subr.mxu0 %v1074
    %1181 = vmatpush1.msra.mxu0 %v1073
    %1182 = vmatprep.subr.mxu0 %v1076
    %1183 = vmatpush1.msra.mxu0 %v1075
    %1184 = vmatprep.subr.mxu0 %v1078
    %1185 = vmatpush1.msra.mxu0 %v1077
    %1186 = vmatprep.subr.mxu0 %v1080
    %1187 = vmatpush1.msra.mxu0 %v1079
    %1188 = vmatprep.subr.mxu0 %v1082
    %1189 = vmatpush1.msra.mxu0 %v1081
    %1190 = vmatprep.subr.mxu0 %v1084
    %1191 = vmatpush1.msra.mxu0 %v1083
    %1192 = vmatprep.subr.mxu0 %v1086
    %1193 = vmatpush1.msra.mxu0 %v1085
    %1194 = vmatprep.subr.mxu0 %v1088
    %1195 = vmatpush1.msra.mxu0 %v1087
    %1196 = vmatprep.subr.mxu0 %v1090
    %1197 = vmatpush1.msra.mxu0 %v1089
    %1198 = vmatprep.subr.mxu0 %v1092
    %1199 = vmatpush1.msra.mxu0 %v1091
    %1200 = vmatprep.subr.mxu0 %v1094
    %1201 = vmatpush1.msra.mxu0 %v1093
    %1202 = vmatprep.subr.mxu0 %v1096
    %1203 = vmatpush1.msra.mxu0 %v1095
    %1204 = vmatprep.subr.mxu0 %v1098
    %1205 = vmatpush1.msra.mxu0 %v1097
    %1206 = vmatprep.subr.mxu0 %v1100
    %1207 = vmatpush1.msra.mxu0 %v1099
    %1208 = vmatprep.subr.mxu0 %v1102
    %1209 = vmatpush1.msra.mxu0 %v1101
    %1210 = vmatprep.subr.mxu0 %v1104
    %1211 = vmatpush1.msra.mxu0 %v1103
    %1212 = vmatprep.subr.mxu0 %v1106
    %1213 = vmatpush1.msra.mxu0 %v1105
    %1214 = vmatprep.subr.mxu0 %v1108
    %1215 = vmatpush1.msra.mxu0 %v1107
    %1216 = vmatprep.subr.mxu0 %v1110
    %1217 = vmatpush1.msra.mxu0 %v1109
    %1218 = vmatprep.subr.mxu0 %v1112
    %1219 = vmatpush1.msra.mxu0 %v1111
    %1220 = vmatprep.subr.mxu0 %v1114
    %1221 = vmatpush1.msra.mxu0 %v1113
    %1222 = vmatprep.subr.mxu0 %v1116
    %1223 = vmatpush1.msra.mxu0 %v1115
    %1224 = vmatprep.subr.mxu0 %v1118
    %1225 = vmatpush1.msra.mxu0 %v1117
    %1226 = vmatprep.subr.mxu0 %v1120
    %1227 = vmatpush1.msra.mxu0 %v1119
    %1228 = vmatprep.mubr.f32.mxu0 %v1055
    %1229 = vmatmul.mubr.f32.gmra.mrb[0].mxu0 %v1054
    %v1230 = vpop.f32.mrb[0].mxu0
    %v1231 = vadd.f32 %v1157, %v1230
    %v1232 = vpop.f32.mrb[0].mxu0
    %v1233 = vadd.f32 %v1161, %v1232
    %1234 = vdwg.mxu0
    %1235 = vmatprep.subr.mxu0 %v1122
    %1236 = vmatpush1.msra.mxu0 %v1121
    %1237 = vmatprep.subr.mxu0 %v1124
    %1238 = vmatpush1.msra.mxu0 %v1123
    %1239 = vmatprep.subr.mxu0 %v1126
    %1240 = vmatpush1.msra.mxu0 %v1125
    %1241 = vmatprep.subr.mxu0 %v1128
    %1242 = vmatpush1.msra.mxu0 %v1127
    %1243 = vmatprep.subr.mxu0 %v1130
    %1244 = vmatpush1.msra.mxu0 %v1129
    %1245 = vmatprep.subr.mxu0 %v1132
    %1246 = vmatpush1.msra.mxu0 %v1131
    %1247 = vmatprep.subr.mxu0 %v1134
    %1248 = vmatpush1.msra.mxu0 %v1133
    %1249 = vmatprep.subr.mxu0 %v1136
    %1250 = vmatpush1.msra.mxu0 %v1135
    %1251 = vmatprep.subr.mxu0 %v1138
    %1252 = vmatpush1.msra.mxu0 %v1137
    %1253 = vmatprep.subr.mxu0 %v1140
    %1254 = vmatpush1.msra.mxu0 %v1139
    %1255 = vmatprep.subr.mxu0 %v1142
    %1256 = vmatpush1.msra.mxu0 %v1141
    %1257 = vmatprep.subr.mxu0 %v1144
    %1258 = vmatpush1.msra.mxu0 %v1143
    %1259 = vmatprep.subr.mxu0 %v1146
    %1260 = vmatpush1.msra.mxu0 %v1145
    %1261 = vmatprep.subr.mxu0 %v1148
    %1262 = vmatpush1.msra.mxu0 %v1147
    %1263 = vmatprep.subr.mxu0 %v1150
    %1264 = vmatpush1.msra.mxu0 %v1149
    %1265 = vmatprep.subr.mxu0 %v1152
    %1266 = vmatpush1.msra.mxu0 %v1151
    %1267 = vmatprep.subr.mxu0 0.0
    %1268 = vmatpush1.msra.mxu0 0.0
    %1269 = vmatprep.subr.mxu0 0.0
    %1270 = vmatpush1.msra.mxu0 0.0
    %1271 = vmatprep.subr.mxu0 0.0
    %1272 = vmatpush1.msra.mxu0 0.0
    %1273 = vmatprep.subr.mxu0 0.0
    %1274 = vmatpush1.msra.mxu0 0.0
    %1275 = vmatprep.subr.mxu0 0.0
    %1276 = vmatpush1.msra.mxu0 0.0
    %1277 = vmatprep.subr.mxu0 0.0
    %1278 = vmatpush1.msra.mxu0 0.0
    %1279 = vmatprep.subr.mxu0 0.0
    %1280 = vmatpush1.msra.mxu0 0.0
    %1281 = vmatprep.subr.mxu0 0.0
    %1282 = vmatpush1.msra.mxu0 0.0
    %1283 = vmatprep.subr.mxu0 0.0
    %1284 = vmatpush1.msra.mxu0 0.0
    %1285 = vmatprep.subr.mxu0 0.0
    %1286 = vmatpush1.msra.mxu0 0.0
    %1287 = vmatprep.subr.mxu0 0.0
    %1288 = vmatpush1.msra.mxu0 0.0
    %1289 = vmatprep.subr.mxu0 0.0
    %1290 = vmatpush1.msra.mxu0 0.0
    %1291 = vmatprep.subr.mxu0 0.0
    %1292 = vmatpush1.msra.mxu0 0.0
    %1293 = vmatprep.subr.mxu0 0.0
    %1294 = vmatpush1.msra.mxu0 0.0
    %1295 = vmatprep.subr.mxu0 0.0
    %1296 = vmatpush1.msra.mxu0 0.0
    %1297 = vmatprep.subr.mxu0 0.0
    %1298 = vmatpush1.msra.mxu0 0.0
    %1299 = vmatprep.mubr.f32.mxu0 0.0
    %1300 = vmatmul.mubr.f32.gmra.mrb[0].mxu0 %v1056
    %v1301 = vpop.f32.mrb[0].mxu0
    %v1302 = vadd.f32 %v1231, %v1301
    %v1303 = vpop.f32.mrb[0].mxu0
    %v1304 = vadd.f32 %v1233, %v1303
    %1305 = vdwg.mxu0
    %v1306 = vmax.f32 %v1302, 0.0
    %v1307 = vmax.f32 %v1304, 0.0
    %v1308 = vld [vmem:[#allocation13] sm:$0xff]
    %v1309 = vld [vmem:[#allocation13 + $0x8] sm:$0xff]
    %v1310 = vld [vmem:[#allocation13 + $0x10] sm:$0xff]
    %v1311 = vld [vmem:[#allocation13 + $0x18] sm:$0xff]
    %v1312 = vld [vmem:[#allocation13 + $0x20] sm:$0xff]
    %v1313 = vld [vmem:[#allocation13 + $0x28] sm:$0xff]
    %v1314 = vld [vmem:[#allocation13 + $0x30] sm:$0xff]
    %v1315 = vld [vmem:[#allocation13 + $0x38] sm:$0xff]
    %v1316 = vld [vmem:[#allocation13 + $0x40] sm:$0xff]
    %v1317 = vld [vmem:[#allocation13 + $0x48] sm:$0xff]
    %v1318 = vld [vmem:[#allocation13 + $0x50] sm:$0xff]
    %v1319 = vld [vmem:[#allocation13 + $0x58] sm:$0xff]
    %v1320 = vld [vmem:[#allocation13 + $0x60] sm:$0xff]
    %v1321 = vld [vmem:[#allocation13 + $0x68] sm:$0xff]
    %v1322 = vld [vmem:[#allocation13 + $0x70] sm:$0xff]
    %v1323 = vld [vmem:[#allocation13 + $0x78] sm:$0xff]
    %v1324 = vld [vmem:[#allocation13 + $0x80] sm:$0xff]
    %v1325 = vld [vmem:[#allocation13 + $0x88] sm:$0xff]
    %v1326 = vld [vmem:[#allocation13 + $0x90] sm:$0xff]
    %v1327 = vld [vmem:[#allocation13 + $0x98] sm:$0xff]
    %v1328 = vld [vmem:[#allocation13 + $0xa0] sm:$0xff]
    %v1329 = vld [vmem:[#allocation13 + $0xa8] sm:$0xff]
    %v1330 = vld [vmem:[#allocation13 + $0xb0] sm:$0xff]
    %v1331 = vld [vmem:[#allocation13 + $0xb8] sm:$0xff]
    %v1332 = vld [vmem:[#allocation13 + $0xc0] sm:$0xff]
    %v1333 = vld [vmem:[#allocation13 + $0xc8] sm:$0xff]
    %v1334 = vld [vmem:[#allocation13 + $0xd0] sm:$0xff]
    %v1335 = vld [vmem:[#allocation13 + $0xd8] sm:$0xff]
    %v1336 = vld [vmem:[#allocation13 + $0xe0] sm:$0xff]
    %v1337 = vld [vmem:[#allocation13 + $0xe8] sm:$0xff]
    %v1338 = vld [vmem:[#allocation13 + $0xf0] sm:$0xff]
    %v1339 = vld [vmem:[#allocation13 + $0xf8] sm:$0xff]
    %1340 = vmatprep.subr.mxu0 0.0
    %1341 = vmatpush1.msra.mxu0 %v1308
    %1342 = vmatprep.subr.mxu0 0.0
    %1343 = vmatpush1.msra.mxu0 %v1309
    %1344 = vmatprep.subr.mxu0 0.0
    %1345 = vmatpush1.msra.mxu0 %v1310
    %1346 = vmatprep.subr.mxu0 0.0
    %1347 = vmatpush1.msra.mxu0 %v1311
    %1348 = vmatprep.subr.mxu0 0.0
    %1349 = vmatpush1.msra.mxu0 %v1312
    %1350 = vmatprep.subr.mxu0 0.0
    %1351 = vmatpush1.msra.mxu0 %v1313
    %1352 = vmatprep.subr.mxu0 0.0
    %1353 = vmatpush1.msra.mxu0 %v1314
    %1354 = vmatprep.subr.mxu0 0.0
    %1355 = vmatpush1.msra.mxu0 %v1315
    %1356 = vmatprep.subr.mxu0 0.0
    %1357 = vmatpush1.msra.mxu0 %v1316
    %1358 = vmatprep.subr.mxu0 0.0
    %1359 = vmatpush1.msra.mxu0 %v1317
    %1360 = vmatprep.subr.mxu0 0.0
    %1361 = vmatpush1.msra.mxu0 %v1318
    %1362 = vmatprep.subr.mxu0 0.0
    %1363 = vmatpush1.msra.mxu0 %v1319
    %1364 = vmatprep.subr.mxu0 0.0
    %1365 = vmatpush1.msra.mxu0 %v1320
    %1366 = vmatprep.subr.mxu0 0.0
    %1367 = vmatpush1.msra.mxu0 %v1321
    %1368 = vmatprep.subr.mxu0 0.0
    %1369 = vmatpush1.msra.mxu0 %v1322
    %1370 = vmatprep.subr.mxu0 0.0
    %1371 = vmatpush1.msra.mxu0 %v1323
    %1372 = vmatprep.subr.mxu0 0.0
    %1373 = vmatpush1.msra.mxu0 %v1324
    %1374 = vmatprep.subr.mxu0 0.0
    %1375 = vmatpush1.msra.mxu0 %v1325
    %1376 = vmatprep.subr.mxu0 0.0
    %1377 = vmatpush1.msra.mxu0 %v1326
    %1378 = vmatprep.subr.mxu0 0.0
    %1379 = vmatpush1.msra.mxu0 %v1327
    %1380 = vmatprep.subr.mxu0 0.0
    %1381 = vmatpush1.msra.mxu0 %v1328
    %1382 = vmatprep.subr.mxu0 0.0
    %1383 = vmatpush1.msra.mxu0 %v1329
    %1384 = vmatprep.subr.mxu0 0.0
    %1385 = vmatpush1.msra.mxu0 %v1330
    %1386 = vmatprep.subr.mxu0 0.0
    %1387 = vmatpush1.msra.mxu0 %v1331
    %1388 = vmatprep.subr.mxu0 0.0
    %1389 = vmatpush1.msra.mxu0 %v1332
    %1390 = vmatprep.subr.mxu0 0.0
    %1391 = vmatpush1.msra.mxu0 %v1333
    %1392 = vmatprep.subr.mxu0 0.0
    %1393 = vmatpush1.msra.mxu0 %v1334
    %1394 = vmatprep.subr.mxu0 0.0
    %1395 = vmatpush1.msra.mxu0 %v1335
    %1396 = vmatprep.subr.mxu0 0.0
    %1397 = vmatpush1.msra.mxu0 %v1336
    %1398 = vmatprep.subr.mxu0 0.0
    %1399 = vmatpush1.msra.mxu0 %v1337
    %1400 = vmatprep.subr.mxu0 0.0
    %1401 = vmatpush1.msra.mxu0 %v1338
    %1402 = vmatprep.subr.mxu0 0.0
    %1403 = vmatpush1.msra.mxu0 %v1339
    %1404 = vmatprep.mubr.f32.mxu0 %v1307
    %1405 = vmatmul.mubr.f32.gmra.mrb[0].mxu0 %v1306
    %v1406 = vpop.f32.mrb[0].mxu0
    %v1407 = vadd.f32 %v138, %v1406
    %v1408 = vpop.f32.mrb[0].mxu0
    %1409 = vdwg.mxu0
    %1410 = vst [vmem:[#allocation16] sm:$0xff] %v1407
    // Predicated region
    $region66: #{tpu_custom_call.1} parent=1 // pred_check
      _
    $region67: #{tpu_custom_call.1} parent=1 // pred_check_branch
      %1412 = sbr.rel (0) target = $region69
    $region68: #{tpu_custom_call.1} parent=1 // pred_region
      %s1414 = ssub.s32 128, 128
      %1415 = vsyncadd [#allocation4], %s1414
      %s1417 = sshll.u32 [#allocation16], 4
      %s1418 = int_to_ptr.vmem [resolvable:$true] %s1417
      %1420 = dma.vmem_to_hbm [thread:$0]  %s1418, 128, %s8, [#allocation4]
    $region69: #{tpu_custom_call.1} parent=1 // pred_fallthru
      _
    // Predicated region
    $region70: #{tpu_custom_call.1} parent=1 // pred_check
      _
    $region71: #{tpu_custom_call.1} parent=1 // pred_check_branch
      %1422 = sbr.rel (0) target = $region73
    $region72: #{tpu_custom_call.1} parent=1 // pred_region
      %1423 = dma.done [#allocation4], 128
    $region73: #{tpu_custom_call.1} parent=1 // pred_fallthru
      _
    %1424 = vsyncpa [#allocation3], 1
    %1425 = vsyncpa [#allocation6], 1
    %1426 = vsyncpa [#allocation9], 1
    %1427 = vsyncpa [#allocation12], 1
    %1428 = vsyncpa [#allocation15], 1
    %1429 = vsyncpa [#allocation4], 1

</llo_original>
